<compile_context>
chip_gen: v5e
topology: v5e:2x2
jax: 0.10.0
libtpu: 0.0.40
codegen_flags: <defaults>
</compile_context>

<pallas_src>
import functools
from typing import NamedTuple

import jax
import jax.numpy as jnp
from jax import lax
from jax.experimental import pallas as pl
from jax.experimental.pallas import tpu as pltpu


def _round_up(x, m):
    return (x + m - 1) // m * m


def _cdiv(a, b):
    return (a + b - 1) // b


# ---------------------------------------------------------------------------
# Kernel
# ---------------------------------------------------------------------------
def mlp_kernel(x_ref, w_in_ref, b_in_ref, w_hid_ref, b_hid_ref,
               w_out_ref, b_out_ref, o_ref, *, n_hidden_matmuls, unroll):
    """One row-tile of the MLP forward pass, fully inside VMEM.

    x_ref     : (tm, input_dim)        f32 (cast to bf16 in-kernel)
    w_in_ref  : (input_dim, H)   bf16  b_in_ref : (1, H)      f32
    w_hid_ref : (n_hid, H, H)    bf16  b_hid_ref: (n_hid, H)  f32
    w_out_ref : (H, O_pad)       bf16  b_out_ref: (1, O_pad)  f32
    o_ref     : (tm, O_pad)            f32
    """
    # First hidden layer: bf16 operands on the MXU, f32 accumulation.
    x = x_ref[...].astype(jnp.bfloat16)
    h = jnp.dot(x, w_in_ref[...], preferred_element_type=jnp.float32)
    h = jnp.maximum(h + b_in_ref[...], 0.0)

    # Remaining hidden layers.  fori_loop bounds live ranges of `h`;
    # full unroll for shallow stacks, partial unroll for deep ones.
    def body(i, h):
        z = jnp.dot(h.astype(w_hid_ref.dtype), w_hid_ref[i],
                    preferred_element_type=jnp.float32)
        return jnp.maximum(z + b_hid_ref[i, :][None, :], 0.0)

    h = lax.fori_loop(0, n_hidden_matmuls, body, h, unroll=unroll)

    # Output linear (no activation); lane-dense store (O padded to 128).
    out = jnp.dot(h.astype(w_out_ref.dtype), w_out_ref[...],
                  preferred_element_type=jnp.float32)
    o_ref[...] = (out + b_out_ref[...]).astype(o_ref.dtype)


# ---------------------------------------------------------------------------
# Parameter preparation (do once, cache the result)
# ---------------------------------------------------------------------------
class PreparedParams(NamedTuple):
    W_in: jax.Array    # (input_dim, H)        bf16
    b_in: jax.Array    # (1, H)                f32
    W_hid: jax.Array   # (max(n_hid,1), H, H)  bf16
    b_hid: jax.Array   # (max(n_hid,1), H)     f32
    W_out: jax.Array   # (H, O_pad)            bf16
    b_out: jax.Array   # (1, O_pad)            f32
    n_hidden_matmuls: int
    output_dim: int


def prepare_params(params):
    """Cast / pad weights once (weights are (in, out) layout, i.e. torch W^T)."""
    W_in, b_in, W_hid, b_hid, W_out, b_out = params
    H = W_in.shape[1]
    O = W_out.shape[1]
    n_hid = W_hid.shape[0]
    O_pad = _round_up(O, 128)

    W_in_b = W_in.astype(jnp.bfloat16)
    b_in2 = b_in.reshape(1, H).astype(jnp.float32)
    if n_hid == 0:  # hidden_layers == 1 -> dummy block (loop runs 0 times)
        W_hid_b = jnp.zeros((1, H, H), jnp.bfloat16)
        b_hid2 = jnp.zeros((1, H), jnp.float32)
    else:
        W_hid_b = W_hid.astype(jnp.bfloat16)
        b_hid2 = b_hid.astype(jnp.float32)
    W_out_b = jnp.zeros((H, O_pad), jnp.bfloat16).at[:, :O].set(
        W_out.astype(jnp.bfloat16))
    b_out2 = jnp.zeros((1, O_pad), jnp.float32).at[0, :O].set(
        b_out.astype(jnp.float32))
    return PreparedParams(W_in_b, b_in2, W_hid_b, b_hid2, W_out_b, b_out2,
                          n_hid, O)


# ---------------------------------------------------------------------------
# Forward wrapper
# ---------------------------------------------------------------------------
def mlp_forward(x, prepared: PreparedParams, *, tm_max=512, interpret=False):
    """x: (B, N_v, input_dim) f32 -> (B, N_v, output_dim) f32."""
    B, N_v, input_dim = x.shape
    H = prepared.W_in.shape[1]
    O_pad = prepared.W_out.shape[1]
    O = prepared.output_dim
    n_hid = prepared.n_hidden_matmuls
    n_hid_blk = prepared.W_hid.shape[0]

    M = B * N_v

    # --- row-tile selection ------------------------------------------------
    # Cap by tm_max, keep padding waste to at most a few sublanes, and use at
    # least 2 tiles when possible so both v7x TensorCores get work.
    tm_cap = max(8, _round_up(min(tm_max, M), 8))
    num_tiles = _cdiv(M, tm_cap)
    if num_tiles < 2 and M > 8:
        num_tiles = 2
    tm = _round_up(_cdiv(M, num_tiles), 8)
    grid_m = _cdiv(M, tm)
    M_pad = grid_m * tm

    # --- input rows: f32, pad only if needed (cast to bf16 inside kernel) ---
    x2 = x.reshape(M, input_dim).astype(jnp.float32)
    if M_pad > M:
        x2 = jnp.pad(x2, ((0, M_pad - M), (0, 0)))

    # --- VMEM budget from the actual resident set + headroom ----------------
    weight_bytes = ((prepared.W_in.size + prepared.W_hid.size
                     + prepared.W_out.size) * 2
                    + (prepared.b_in.size + prepared.b_hid.size
                       + prepared.b_out.size) * 4)
    tile_bytes = 2 * tm * input_dim * 4 + 2 * tm * O_pad * 4   # double-buffered
    act_bytes = 3 * tm * H * 4                                  # live activations
    vmem_limit = weight_bytes + tile_bytes + act_bytes + 8 * 1024 * 1024
    vmem_limit = max(24 * 1024 * 1024, min(vmem_limit, 112 * 1024 * 1024))

    flops = 2 * M_pad * (input_dim * H + n_hid * H * H + H * O_pad)
    bytes_accessed = (x2.size * 4 + weight_bytes + M_pad * O_pad * 4)

    unroll = True if n_hid <= 8 else 4

    # Grid-invariant parameter specs: constant index_map, single buffer
    # (Buffered(1)) -> no useless second VMEM copy.
    def inv_spec(block_shape):
        nd = len(block_shape)
        idx = (lambda i: (0,) * nd)
        return pl.BlockSpec(block_shape, idx, pipeline_mode=pl.Buffered(1))

    out = pl.pallas_call(
        functools.partial(mlp_kernel, n_hidden_matmuls=n_hid, unroll=unroll),
        out_shape=jax.ShapeDtypeStruct((M_pad, O_pad), jnp.float32),
        grid=(grid_m,),
        in_specs=[
            pl.BlockSpec((tm, input_dim), lambda i: (i, 0)),   # x row tile
            inv_spec((input_dim, H)),                          # W_in
            inv_spec((1, H)),                                  # b_in
            inv_spec((n_hid_blk, H, H)),                       # W_hid
            inv_spec((n_hid_blk, H)),                          # b_hid
            inv_spec((H, O_pad)),                              # W_out
            inv_spec((1, O_pad)),                              # b_out
        ],
        out_specs=pl.BlockSpec((tm, O_pad), lambda i: (i, 0)),
        compiler_params=pltpu.CompilerParams(
            dimension_semantics=("parallel",),
            vmem_limit_bytes=int(vmem_limit),
        ),
        cost_estimate=pl.CostEstimate(
            flops=flops, transcendentals=0, bytes_accessed=bytes_accessed),
        interpret=interpret,
    )(x2, prepared.W_in, prepared.b_in, prepared.W_hid, prepared.b_hid,
      prepared.W_out, prepared.b_out)

    return out[:M, :O].reshape(B, N_v, O)


# ---------------------------------------------------------------------------
# Synthetic parameters + references
# ---------------------------------------------------------------------------
def init_params(key, input_dim, output_dim, hidden_dim, hidden_layers):
    """Deterministic synthetic parameters (weights already in (in, out) layout)."""
    ks = jax.random.split(key, 6)
    scale = 0.1
    W_in = scale * jax.random.normal(ks[0], (input_dim, hidden_dim), jnp.float32)
    b_in = scale * jax.random.normal(ks[1], (hidden_dim,), jnp.float32)
    W_hid = scale * jax.random.normal(
        ks[2], (hidden_layers - 1, hidden_dim, hidden_dim), jnp.float32)
    b_hid = scale * jax.random.normal(
        ks[3], (hidden_layers - 1, hidden_dim), jnp.float32)
    W_out = scale * jax.random.normal(ks[4], (hidden_dim, output_dim), jnp.float32)
    b_out = scale * jax.random.normal(ks[5], (output_dim,), jnp.float32)
    return W_in, b_in, W_hid, b_hid, W_out, b_out


def mlp_reference_f32(x, params):
    """Pure-JAX f32 reference matching the PyTorch forward."""
    W_in, b_in, W_hid, b_hid, W_out, b_out = params
    B, N_v, _ = x.shape
    h = x.reshape(B * N_v, -1)
    h = jnp.maximum(h @ W_in + b_in, 0.0)
    for i in range(W_hid.shape[0]):
        h = jnp.maximum(h @ W_hid[i] + b_hid[i], 0.0)
    out = h @ W_out + b_out
    return out.reshape(B, N_v, -1)


def mlp_reference_bf16(x, params):
    """Same math as the kernel: bf16 operands, f32 accumulation, f32 bias/ReLU."""
    W_in, b_in, W_hid, b_hid, W_out, b_out = params
    B, N_v, _ = x.shape

    def mm(a, w):
        return jnp.dot(a.astype(jnp.bfloat16), w.astype(jnp.bfloat16),
                       preferred_element_type=jnp.float32)

    h = x.reshape(B * N_v, -1)
    h = jnp.maximum(mm(h, W_in) + b_in, 0.0)
    for i in range(W_hid.shape[0]):
        h = jnp.maximum(mm(h, W_hid[i]) + b_hid[i], 0.0)
    out = mm(h, W_out) + b_out
    return out.reshape(B, N_v, -1)


if __name__ == "__main__":
    # Small shapes consistent with forward(input: (batch, N_v, input_dim));
    # hidden_dim / hidden_layers match the module defaults.
    batch, N_v = 2, 8
    input_dim, output_dim = 16, 8
    hidden_dim, hidden_layers = 256, 8

    key = jax.random.PRNGKey(0)
    kx, kp = jax.random.split(key)
    x = jax.random.normal(kx, (batch, N_v, input_dim), jnp.float32)
    params = init_params(kp, input_dim, output_dim, hidden_dim, hidden_layers)

    # Pre-cast / pre-pad weights ONCE (cache this across forward calls).
    prepared = prepare_params(params)

    out = mlp_forward(x, prepared)
    out = jax.block_until_ready(out)
    assert out.shape == (batch, N_v, output_dim)

    ref_bf16 = mlp_reference_bf16(x, params)   # same bf16/f32-accum math
    ref_f32 = mlp_reference_f32(x, params)     # full-f32 PyTorch-equivalent

    assert jnp.allclose(out, ref_bf16, atol=1e-2, rtol=1e-2), \
        "mismatch vs bf16-operand reference"
    assert jnp.allclose(out, ref_f32, atol=1e-1, rtol=1e-1), \
        "mismatch vs f32 reference"

    print("KERNEL_OK")
</pallas_src>

<mosaic_0001>
module attributes {stable_mosaic.version = 11 : i64} {
  func.func @mlp_kernel(%arg0: i32, %arg1: memref<8x16xf32, #tpu.memory_space<vmem>>, %arg2: memref<16x256xbf16, #tpu.memory_space<vmem>>, %arg3: memref<1x256xf32, #tpu.memory_space<vmem>>, %arg4: memref<7x256x256xbf16, #tpu.memory_space<vmem>>, %arg5: memref<7x256xf32, #tpu.memory_space<vmem>>, %arg6: memref<256x128xbf16, #tpu.memory_space<vmem>>, %arg7: memref<1x128xf32, #tpu.memory_space<vmem>>, %arg8: memref<8x128xf32, #tpu.memory_space<vmem>>) attributes {dimension_semantics = [#tpu.dimension_semantics<parallel>], iteration_bounds = array<i64: 2>, scalar_prefetch = 0 : i64, scratch_operands = 0 : i64, tpu.core_type = #tpu.core_type<tc>, window_params = [{transform_indices = @transform_0, window_bounds = array<i64: 8, 16>}, {pipeline_mode = #tpu.pipeline_mode<synchronous>, transform_indices = @transform_1, window_bounds = array<i64: 16, 256>}, {pipeline_mode = #tpu.pipeline_mode<synchronous>, transform_indices = @transform_2, window_bounds = array<i64: 1, 256>}, {pipeline_mode = #tpu.pipeline_mode<synchronous>, transform_indices = @transform_3, window_bounds = array<i64: 7, 256, 256>}, {pipeline_mode = #tpu.pipeline_mode<synchronous>, transform_indices = @transform_4, window_bounds = array<i64: 7, 256>}, {pipeline_mode = #tpu.pipeline_mode<synchronous>, transform_indices = @transform_5, window_bounds = array<i64: 256, 128>}, {pipeline_mode = #tpu.pipeline_mode<synchronous>, transform_indices = @transform_6, window_bounds = array<i64: 1, 128>}, {transform_indices = @transform_7, window_bounds = array<i64: 8, 128>}]} {
    %c0 = arith.constant 0 : index
    %c0_0 = arith.constant 0 : index
    %0 = vector.load %arg1[%c0, %c0_0] : memref<8x16xf32, #tpu.memory_space<vmem>>, vector<8x16xf32>
    %1 = arith.truncf %0 : vector<8x16xf32> to vector<8x16xbf16>
    %c0_1 = arith.constant 0 : index
    %c0_2 = arith.constant 0 : index
    %2 = vector.load %arg2[%c0_1, %c0_2] : memref<16x256xbf16, #tpu.memory_space<vmem>>, vector<16x256xbf16>
    %cst = arith.constant dense<0.000000e+00> : vector<8x256xf32>
    %3 = tpu.matmul %1, %2, %cst {dimension_numbers = #tpu.dot_dimension_numbers<[1], [0], [0], [1], [0, 0, 1, 1], [], []>} : vector<8x16xbf16>, vector<16x256xbf16>, vector<8x256xf32> -> vector<8x256xf32>
    %c0_3 = arith.constant 0 : index
    %c0_4 = arith.constant 0 : index
    %4 = vector.load %arg3[%c0_3, %c0_4] : memref<1x256xf32, #tpu.memory_space<vmem>>, vector<1x256xf32>
    %5 = vector.broadcast %4 : vector<1x256xf32> to vector<8x256xf32>
    %6 = arith.addf %3, %5 : vector<8x256xf32>
    %cst_5 = arith.constant 0.000000e+00 : f32
    %7 = vector.broadcast %cst_5 : f32 to vector<8x256xf32>
    %8 = arith.maximumf %6, %7 : vector<8x256xf32>
    %c0_i32 = arith.constant 0 : i32
    %9 = arith.truncf %8 : vector<8x256xf32> to vector<8x256xbf16>
    %10 = arith.index_cast %c0_i32 : i32 to index
    %c0_6 = arith.constant 0 : index
    %c0_7 = arith.constant 0 : index
    %11 = vector.load %arg4[%10, %c0_6, %c0_7] : memref<7x256x256xbf16, #tpu.memory_space<vmem>>, vector<1x256x256xbf16>
    %12 = vector.shape_cast %11 : vector<1x256x256xbf16> to vector<256x256xbf16>
    %cst_8 = arith.constant dense<0.000000e+00> : vector<8x256xf32>
    %13 = tpu.matmul %9, %12, %cst_8 {dimension_numbers = #tpu.dot_dimension_numbers<[1], [0], [0], [1], [0, 0, 1, 1], [], []>} : vector<8x256xbf16>, vector<256x256xbf16>, vector<8x256xf32> -> vector<8x256xf32>
    %14 = arith.index_cast %c0_i32 : i32 to index
    %c0_9 = arith.constant 0 : index
    %15 = vector.load %arg5[%14, %c0_9] : memref<7x256xf32, #tpu.memory_space<vmem>>, vector<1x256xf32>
    %16 = vector.shape_cast %15 : vector<1x256xf32> to vector<256xf32>
    %17 = vector.shape_cast %16 : vector<256xf32> to vector<1x256xf32>
    %18 = vector.broadcast %17 : vector<1x256xf32> to vector<8x256xf32>
    %19 = arith.addf %13, %18 : vector<8x256xf32>
    %cst_10 = arith.constant 0.000000e+00 : f32
    %20 = vector.broadcast %cst_10 : f32 to vector<8x256xf32>
    %21 = arith.maximumf %19, %20 : vector<8x256xf32>
    %c1_i32 = arith.constant 1 : i32
    %22 = arith.truncf %21 : vector<8x256xf32> to vector<8x256xbf16>
    %23 = arith.index_cast %c1_i32 : i32 to index
    %c0_11 = arith.constant 0 : index
    %c0_12 = arith.constant 0 : index
    %24 = vector.load %arg4[%23, %c0_11, %c0_12] : memref<7x256x256xbf16, #tpu.memory_space<vmem>>, vector<1x256x256xbf16>
    %25 = vector.shape_cast %24 : vector<1x256x256xbf16> to vector<256x256xbf16>
    %cst_13 = arith.constant dense<0.000000e+00> : vector<8x256xf32>
    %26 = tpu.matmul %22, %25, %cst_13 {dimension_numbers = #tpu.dot_dimension_numbers<[1], [0], [0], [1], [0, 0, 1, 1], [], []>} : vector<8x256xbf16>, vector<256x256xbf16>, vector<8x256xf32> -> vector<8x256xf32>
    %27 = arith.index_cast %c1_i32 : i32 to index
    %c0_14 = arith.constant 0 : index
    %28 = vector.load %arg5[%27, %c0_14] : memref<7x256xf32, #tpu.memory_space<vmem>>, vector<1x256xf32>
    %29 = vector.shape_cast %28 : vector<1x256xf32> to vector<256xf32>
    %30 = vector.shape_cast %29 : vector<256xf32> to vector<1x256xf32>
    %31 = vector.broadcast %30 : vector<1x256xf32> to vector<8x256xf32>
    %32 = arith.addf %26, %31 : vector<8x256xf32>
    %cst_15 = arith.constant 0.000000e+00 : f32
    %33 = vector.broadcast %cst_15 : f32 to vector<8x256xf32>
    %34 = arith.maximumf %32, %33 : vector<8x256xf32>
    %c2_i32 = arith.constant 2 : i32
    %35 = arith.truncf %34 : vector<8x256xf32> to vector<8x256xbf16>
    %36 = arith.index_cast %c2_i32 : i32 to index
    %c0_16 = arith.constant 0 : index
    %c0_17 = arith.constant 0 : index
    %37 = vector.load %arg4[%36, %c0_16, %c0_17] : memref<7x256x256xbf16, #tpu.memory_space<vmem>>, vector<1x256x256xbf16>
    %38 = vector.shape_cast %37 : vector<1x256x256xbf16> to vector<256x256xbf16>
    %cst_18 = arith.constant dense<0.000000e+00> : vector<8x256xf32>
    %39 = tpu.matmul %35, %38, %cst_18 {dimension_numbers = #tpu.dot_dimension_numbers<[1], [0], [0], [1], [0, 0, 1, 1], [], []>} : vector<8x256xbf16>, vector<256x256xbf16>, vector<8x256xf32> -> vector<8x256xf32>
    %40 = arith.index_cast %c2_i32 : i32 to index
    %c0_19 = arith.constant 0 : index
    %41 = vector.load %arg5[%40, %c0_19] : memref<7x256xf32, #tpu.memory_space<vmem>>, vector<1x256xf32>
    %42 = vector.shape_cast %41 : vector<1x256xf32> to vector<256xf32>
    %43 = vector.shape_cast %42 : vector<256xf32> to vector<1x256xf32>
    %44 = vector.broadcast %43 : vector<1x256xf32> to vector<8x256xf32>
    %45 = arith.addf %39, %44 : vector<8x256xf32>
    %cst_20 = arith.constant 0.000000e+00 : f32
    %46 = vector.broadcast %cst_20 : f32 to vector<8x256xf32>
    %47 = arith.maximumf %45, %46 : vector<8x256xf32>
    %c3_i32 = arith.constant 3 : i32
    %48 = arith.truncf %47 : vector<8x256xf32> to vector<8x256xbf16>
    %49 = arith.index_cast %c3_i32 : i32 to index
    %c0_21 = arith.constant 0 : index
    %c0_22 = arith.constant 0 : index
    %50 = vector.load %arg4[%49, %c0_21, %c0_22] : memref<7x256x256xbf16, #tpu.memory_space<vmem>>, vector<1x256x256xbf16>
    %51 = vector.shape_cast %50 : vector<1x256x256xbf16> to vector<256x256xbf16>
    %cst_23 = arith.constant dense<0.000000e+00> : vector<8x256xf32>
    %52 = tpu.matmul %48, %51, %cst_23 {dimension_numbers = #tpu.dot_dimension_numbers<[1], [0], [0], [1], [0, 0, 1, 1], [], []>} : vector<8x256xbf16>, vector<256x256xbf16>, vector<8x256xf32> -> vector<8x256xf32>
    %53 = arith.index_cast %c3_i32 : i32 to index
    %c0_24 = arith.constant 0 : index
    %54 = vector.load %arg5[%53, %c0_24] : memref<7x256xf32, #tpu.memory_space<vmem>>, vector<1x256xf32>
    %55 = vector.shape_cast %54 : vector<1x256xf32> to vector<256xf32>
    %56 = vector.shape_cast %55 : vector<256xf32> to vector<1x256xf32>
    %57 = vector.broadcast %56 : vector<1x256xf32> to vector<8x256xf32>
    %58 = arith.addf %52, %57 : vector<8x256xf32>
    %cst_25 = arith.constant 0.000000e+00 : f32
    %59 = vector.broadcast %cst_25 : f32 to vector<8x256xf32>
    %60 = arith.maximumf %58, %59 : vector<8x256xf32>
    %c4_i32 = arith.constant 4 : i32
    %61 = arith.truncf %60 : vector<8x256xf32> to vector<8x256xbf16>
    %62 = arith.index_cast %c4_i32 : i32 to index
    %c0_26 = arith.constant 0 : index
    %c0_27 = arith.constant 0 : index
    %63 = vector.load %arg4[%62, %c0_26, %c0_27] : memref<7x256x256xbf16, #tpu.memory_space<vmem>>, vector<1x256x256xbf16>
    %64 = vector.shape_cast %63 : vector<1x256x256xbf16> to vector<256x256xbf16>
    %cst_28 = arith.constant dense<0.000000e+00> : vector<8x256xf32>
    %65 = tpu.matmul %61, %64, %cst_28 {dimension_numbers = #tpu.dot_dimension_numbers<[1], [0], [0], [1], [0, 0, 1, 1], [], []>} : vector<8x256xbf16>, vector<256x256xbf16>, vector<8x256xf32> -> vector<8x256xf32>
    %66 = arith.index_cast %c4_i32 : i32 to index
    %c0_29 = arith.constant 0 : index
    %67 = vector.load %arg5[%66, %c0_29] : memref<7x256xf32, #tpu.memory_space<vmem>>, vector<1x256xf32>
    %68 = vector.shape_cast %67 : vector<1x256xf32> to vector<256xf32>
    %69 = vector.shape_cast %68 : vector<256xf32> to vector<1x256xf32>
    %70 = vector.broadcast %69 : vector<1x256xf32> to vector<8x256xf32>
    %71 = arith.addf %65, %70 : vector<8x256xf32>
    %cst_30 = arith.constant 0.000000e+00 : f32
    %72 = vector.broadcast %cst_30 : f32 to vector<8x256xf32>
    %73 = arith.maximumf %71, %72 : vector<8x256xf32>
    %c5_i32 = arith.constant 5 : i32
    %74 = arith.truncf %73 : vector<8x256xf32> to vector<8x256xbf16>
    %75 = arith.index_cast %c5_i32 : i32 to index
    %c0_31 = arith.constant 0 : index
    %c0_32 = arith.constant 0 : index
    %76 = vector.load %arg4[%75, %c0_31, %c0_32] : memref<7x256x256xbf16, #tpu.memory_space<vmem>>, vector<1x256x256xbf16>
    %77 = vector.shape_cast %76 : vector<1x256x256xbf16> to vector<256x256xbf16>
    %cst_33 = arith.constant dense<0.000000e+00> : vector<8x256xf32>
    %78 = tpu.matmul %74, %77, %cst_33 {dimension_numbers = #tpu.dot_dimension_numbers<[1], [0], [0], [1], [0, 0, 1, 1], [], []>} : vector<8x256xbf16>, vector<256x256xbf16>, vector<8x256xf32> -> vector<8x256xf32>
    %79 = arith.index_cast %c5_i32 : i32 to index
    %c0_34 = arith.constant 0 : index
    %80 = vector.load %arg5[%79, %c0_34] : memref<7x256xf32, #tpu.memory_space<vmem>>, vector<1x256xf32>
    %81 = vector.shape_cast %80 : vector<1x256xf32> to vector<256xf32>
    %82 = vector.shape_cast %81 : vector<256xf32> to vector<1x256xf32>
    %83 = vector.broadcast %82 : vector<1x256xf32> to vector<8x256xf32>
    %84 = arith.addf %78, %83 : vector<8x256xf32>
    %cst_35 = arith.constant 0.000000e+00 : f32
    %85 = vector.broadcast %cst_35 : f32 to vector<8x256xf32>
    %86 = arith.maximumf %84, %85 : vector<8x256xf32>
    %c6_i32 = arith.constant 6 : i32
    %87 = arith.truncf %86 : vector<8x256xf32> to vector<8x256xbf16>
    %88 = arith.index_cast %c6_i32 : i32 to index
    %c0_36 = arith.constant 0 : index
    %c0_37 = arith.constant 0 : index
    %89 = vector.load %arg4[%88, %c0_36, %c0_37] : memref<7x256x256xbf16, #tpu.memory_space<vmem>>, vector<1x256x256xbf16>
    %90 = vector.shape_cast %89 : vector<1x256x256xbf16> to vector<256x256xbf16>
    %cst_38 = arith.constant dense<0.000000e+00> : vector<8x256xf32>
    %91 = tpu.matmul %87, %90, %cst_38 {dimension_numbers = #tpu.dot_dimension_numbers<[1], [0], [0], [1], [0, 0, 1, 1], [], []>} : vector<8x256xbf16>, vector<256x256xbf16>, vector<8x256xf32> -> vector<8x256xf32>
    %92 = arith.index_cast %c6_i32 : i32 to index
    %c0_39 = arith.constant 0 : index
    %93 = vector.load %arg5[%92, %c0_39] : memref<7x256xf32, #tpu.memory_space<vmem>>, vector<1x256xf32>
    %94 = vector.shape_cast %93 : vector<1x256xf32> to vector<256xf32>
    %95 = vector.shape_cast %94 : vector<256xf32> to vector<1x256xf32>
    %96 = vector.broadcast %95 : vector<1x256xf32> to vector<8x256xf32>
    %97 = arith.addf %91, %96 : vector<8x256xf32>
    %cst_40 = arith.constant 0.000000e+00 : f32
    %98 = vector.broadcast %cst_40 : f32 to vector<8x256xf32>
    %99 = arith.maximumf %97, %98 : vector<8x256xf32>
    %c7_i32 = arith.constant 7 : i32
    %100 = arith.truncf %99 : vector<8x256xf32> to vector<8x256xbf16>
    %c0_41 = arith.constant 0 : index
    %c0_42 = arith.constant 0 : index
    %101 = vector.load %arg6[%c0_41, %c0_42] : memref<256x128xbf16, #tpu.memory_space<vmem>>, vector<256x128xbf16>
    %cst_43 = arith.constant dense<0.000000e+00> : vector<8x128xf32>
    %102 = tpu.matmul %100, %101, %cst_43 {dimension_numbers = #tpu.dot_dimension_numbers<[1], [0], [0], [1], [0, 0, 1, 1], [], []>} : vector<8x256xbf16>, vector<256x128xbf16>, vector<8x128xf32> -> vector<8x128xf32>
    %c0_44 = arith.constant 0 : index
    %c0_45 = arith.constant 0 : index
    %103 = vector.load %arg7[%c0_44, %c0_45] : memref<1x128xf32, #tpu.memory_space<vmem>>, vector<1x128xf32>
    %104 = vector.broadcast %103 : vector<1x128xf32> to vector<8x128xf32>
    %105 = arith.addf %102, %104 : vector<8x128xf32>
    %c0_46 = arith.constant 0 : index
    %c0_47 = arith.constant 0 : index
    %106 = vector.load %arg8[%c0_46, %c0_47] : memref<8x128xf32, #tpu.memory_space<vmem>>, vector<8x128xf32>
    tpu.vector_store %arg8[%c0_46, %c0_47], %105 {strides = array<i32>} : memref<8x128xf32, #tpu.memory_space<vmem>>, vector<8x128xf32>,
    return
  }
  func.func @transform_0(%arg0: i32) -> (i32, i32) {
    %c0_i32 = arith.constant 0 : i32
    %c0_i32_0 = arith.constant 0 : i32
    return %arg0, %c0_i32 : i32, i32
  }
  func.func @transform_1(%arg0: i32) -> (i32, i32) {
    %c0_i32 = arith.constant 0 : i32
    %c0_i32_0 = arith.constant 0 : i32
    %c0_i32_1 = arith.constant 0 : i32
    return %c0_i32, %c0_i32_0 : i32, i32
  }
  func.func @transform_2(%arg0: i32) -> (i32, i32) {
    %c0_i32 = arith.constant 0 : i32
    %c0_i32_0 = arith.constant 0 : i32
    %c0_i32_1 = arith.constant 0 : i32
    return %c0_i32, %c0_i32_0 : i32, i32
  }
  func.func @transform_3(%arg0: i32) -> (i32, i32, i32) {
    %c0_i32 = arith.constant 0 : i32
    %c0_i32_0 = arith.constant 0 : i32
    %c0_i32_1 = arith.constant 0 : i32
    %c0_i32_2 = arith.constant 0 : i32
    return %c0_i32, %c0_i32_0, %c0_i32_1 : i32, i32, i32
  }
  func.func @transform_4(%arg0: i32) -> (i32, i32) {
    %c0_i32 = arith.constant 0 : i32
    %c0_i32_0 = arith.constant 0 : i32
    %c0_i32_1 = arith.constant 0 : i32
    return %c0_i32, %c0_i32_0 : i32, i32
  }
  func.func @transform_5(%arg0: i32) -> (i32, i32) {
    %c0_i32 = arith.constant 0 : i32
    %c0_i32_0 = arith.constant 0 : i32
    %c0_i32_1 = arith.constant 0 : i32
    return %c0_i32, %c0_i32_0 : i32, i32
  }
  func.func @transform_6(%arg0: i32) -> (i32, i32) {
    %c0_i32 = arith.constant 0 : i32
    %c0_i32_0 = arith.constant 0 : i32
    %c0_i32_1 = arith.constant 0 : i32
    return %c0_i32, %c0_i32_0 : i32, i32
  }
  func.func @transform_7(%arg0: i32) -> (i32, i32) {
    %c0_i32 = arith.constant 0 : i32
    %c0_i32_0 = arith.constant 0 : i32
    return %arg0, %c0_i32 : i32, i32
  }
}

</mosaic_0001>

<llo_original>
// kernel: tpu_custom_call.1
$region0: #{tpu_custom_call.1}
  #allocation0 [shape = 'u32[]', space=smem, size = 0x4, offset = 0x4, fixed_abs, tag = 'smem constant byte address 0x4 - core index']
  #allocation1 [shape = 'u32[72,128]{1,0:T(1,128)}', space=vmem, size = 0x9000, scoped, tag = 'internal scratch']
  %s0 = inlined_call_operand.hbm [shape: f32[16,16], index: 0, kind: input, shape index: {}]
  %s1 = inlined_call_operand.hbm [shape: bf16[16,256], index: 1, kind: input, shape index: {}]
  %s2 = inlined_call_operand.hbm [shape: f32[1,256], index: 2, kind: input, shape index: {}]
  %s3 = inlined_call_operand.hbm [shape: bf16[7,256,256], index: 3, kind: input, shape index: {}]
  %s4 = inlined_call_operand.hbm [shape: f32[7,256], index: 4, kind: input, shape index: {}]
  %s5 = inlined_call_operand.hbm [shape: bf16[256,128], index: 5, kind: input, shape index: {}]
  %s6 = inlined_call_operand.vmem [shape: f32[1,128], index: 6, kind: input, shape index: {}]
  %s7 = inlined_call_operand.hbm [shape: f32[16,128], index: 7, kind: output, shape index: {}]
  %s8 = sld [smem:[#allocation0]]
  $region85: #{tpu_custom_call.1} parent=0
    _
  %s10 = ssub.s32 1, %s8
  %s11 = scalar_select 0, %s10, %s8
  $region1: #{tpu_custom_call.1} parent=0
    #allocation2 [shape = 'u8[8192]{0}', space=vmem, size = 0x2000, scoped, tag = 'input window, operand 0']
    #allocation3 [shape = 's32[2]{0}', space=sflag, size = 0x8, scoped, tag = 'scoped memory for tpu_custom_call.1']
    #allocation4 [shape = 's32[2]{0}', space=sflag, size = 0x8, scoped, tag = 'scoped memory for tpu_custom_call.1']
    #allocation5 [shape = 'u8[8192]{0}', space=vmem, size = 0x2000, scoped, tag = 'input window, operand 1, single buffered']
    #allocation6 [shape = 's32[1]{0}', space=sflag, size = 0x4, scoped, tag = 'scoped memory for tpu_custom_call.1']
    #allocation7 [shape = 'u8[1024]{0}', space=vmem, size = 0x400, scoped, tag = 'input window, operand 2, single buffered']
    #allocation8 [shape = 'u8[917504]{0}', space=vmem, size = 0xe0000, scoped, tag = 'input window, operand 3, single buffered']
    #allocation9 [shape = 's32[1]{0}', space=sflag, size = 0x4, scoped, tag = 'scoped memory for tpu_custom_call.1']
    #allocation10 [shape = 'u8[8192]{0}', space=vmem, size = 0x2000, scoped, tag = 'input window, operand 4, single buffered']
    #allocation11 [shape = 'u8[65536]{0}', space=vmem, size = 0x10000, scoped, tag = 'input window, operand 5, single buffered']
    #allocation12 [shape = 's32[1]{0}', space=sflag, size = 0x4, scoped, tag = 'scoped memory for tpu_custom_call.1']
    #allocation13 [shape = 'u8[8192]{0}', space=vmem, size = 0x2000, scoped, tag = 'output window, operand 0']
    %12 = vsyncpa [#allocation3], 0
    %s13 = scalar_lea.sflag [#allocation3], 1
    %14 = vsyncpa %s13, 0
    %15 = vsyncpa [#allocation6], 0
    %16 = vsyncpa [#allocation9], 0
    %17 = vsyncpa [#allocation12], 0
    %18 = vsyncpa [#allocation4], 0
    %s19 = scalar_lea.sflag [#allocation4], 1
    %20 = vsyncpa %s19, 0
    loop: start=0, step=1, limit=4
    $region2: #{tpu_custom_call.1} parent=1 // loop_pre_header
      _
    $region3: #{tpu_custom_call.1} parent=1 // loop_header
      %s22 = sphi 0, %s26
      %p23 = scmp.ge.s32.totalorder %s22, 4
      %s32 = sphi 0, %s34
      %s35 = sphi 0, %s32
      %s36 = sphi 0, %s35
      %s52 = sphi 0, %s36
      %s56 = sphi 0, %s56
      %s58 = sphi 0, %s56
      %s59 = sphi 0, %s58
      %s73 = sphi 0, %s59
      %s77 = sphi 0, %s77
      %s79 = sphi 0, %s77
      %s80 = sphi 0, %s79
      %s94 = sphi 0, %s80
      %s98 = sphi 0, %s98
      %s100 = sphi 0, %s98
      %s101 = sphi 0, %s100
      %s115 = sphi 0, %s101
      %s119 = sphi 0, %s119
      %s121 = sphi 0, %s119
      %s122 = sphi 0, %s121
      %s136 = sphi 0, %s122
      %s140 = sphi 0, %s140
      %s142 = sphi 0, %s140
      %s143 = sphi 0, %s142
      %s157 = sphi 0, %s143
      %s161 = sphi 0, %s161
      %s163 = sphi 0, %s161
      %s164 = sphi 0, %s163
      %s178 = sphi 0, %s164
      %s184 = sphi 0, %s186
      %s187 = sphi 0, %s184
      %s188 = sphi 0, %s187
      %s204 = sphi 0, %s188
    $region4: #{tpu_custom_call.1} parent=1 // loop_header_branch
      %25 = sbr.rel (%p23) target = $region8
    $region5: #{tpu_custom_call.1} parent=1 // loop_body
      %s27 = ssub.s32 %s22, 1
      %s28 = ssub.s32 %s22, 2
      %s29 = sadd.s32 %s22, 1
      %s30 = ssub.s32 %s22, %s29
      %p31 = scmp.eq.s32.totalorder %s30, 0
      %s33 = sadd.s32 %s32, 1
      %s34 = scalar_select %p31, %s32, %s33
      %p37 = pneg %p31
      %p38 = scmp.eq.s32.totalorder %s22, 1
      %p39 = por %p37, %p38
      %p40 = scmp.ne.s32.totalorder %s32, %s35
      %p41 = scmp.eq.s32.totalorder %s22, 0
      %p42 = por %p40, %p41
      %p43 = scmp.ne.s32.totalorder %s32, %s35
      %p44 = scmp.eq.s32.totalorder %s27, 1
      %p45 = por %p43, %p44
      %p46 = scmp.ne.s32.totalorder %s35, %s36
      %p47 = scmp.eq.s32.totalorder %s27, 0
      %p48 = por %p46, %p47
      %p49 = scmp.ne.s32.totalorder %s35, %s36
      %p50 = scmp.eq.s32.totalorder %s28, 1
      %p51 = por %p49, %p50
      %p53 = scmp.ne.s32.totalorder %s36, %s52
      %p54 = scmp.eq.s32.totalorder %s28, 0
      %p55 = por %p53, %p54
      %s57 = sadd.s32 %s56, 1
      %p60 = scmp.eq.s32.totalorder %s22, 1
      %p61 = scmp.ne.s32.totalorder %s56, %s58
      %p62 = scmp.eq.s32.totalorder %s22, 0
      %p63 = por %p61, %p62
      %p64 = scmp.ne.s32.totalorder %s56, %s58
      %p65 = scmp.eq.s32.totalorder %s27, 1
      %p66 = por %p64, %p65
      %p67 = scmp.ne.s32.totalorder %s58, %s59
      %p68 = scmp.eq.s32.totalorder %s27, 0
      %p69 = por %p67, %p68
      %p70 = scmp.ne.s32.totalorder %s58, %s59
      %p71 = scmp.eq.s32.totalorder %s28, 1
      %p72 = por %p70, %p71
      %p74 = scmp.ne.s32.totalorder %s59, %s73
      %p75 = scmp.eq.s32.totalorder %s28, 0
      %p76 = por %p74, %p75
      %s78 = sadd.s32 %s77, 1
      %p81 = scmp.eq.s32.totalorder %s22, 1
      %p82 = scmp.ne.s32.totalorder %s77, %s79
      %p83 = scmp.eq.s32.totalorder %s22, 0
      %p84 = por %p82, %p83
      %p85 = scmp.ne.s32.totalorder %s77, %s79
      %p86 = scmp.eq.s32.totalorder %s27, 1
      %p87 = por %p85, %p86
      %p88 = scmp.ne.s32.totalorder %s79, %s80
      %p89 = scmp.eq.s32.totalorder %s27, 0
      %p90 = por %p88, %p89
      %p91 = scmp.ne.s32.totalorder %s79, %s80
      %p92 = scmp.eq.s32.totalorder %s28, 1
      %p93 = por %p91, %p92
      %p95 = scmp.ne.s32.totalorder %s80, %s94
      %p96 = scmp.eq.s32.totalorder %s28, 0
      %p97 = por %p95, %p96
      %s99 = sadd.s32 %s98, 1
      %p102 = scmp.eq.s32.totalorder %s22, 1
      %p103 = scmp.ne.s32.totalorder %s98, %s100
      %p104 = scmp.eq.s32.totalorder %s22, 0
      %p105 = por %p103, %p104
      %p106 = scmp.ne.s32.totalorder %s98, %s100
      %p107 = scmp.eq.s32.totalorder %s27, 1
      %p108 = por %p106, %p107
      %p109 = scmp.ne.s32.totalorder %s100, %s101
      %p110 = scmp.eq.s32.totalorder %s27, 0
      %p111 = por %p109, %p110
      %p112 = scmp.ne.s32.totalorder %s100, %s101
      %p113 = scmp.eq.s32.totalorder %s28, 1
      %p114 = por %p112, %p113
      %p116 = scmp.ne.s32.totalorder %s101, %s115
      %p117 = scmp.eq.s32.totalorder %s28, 0
      %p118 = por %p116, %p117
      %s120 = sadd.s32 %s119, 1
      %p123 = scmp.eq.s32.totalorder %s22, 1
      %p124 = scmp.ne.s32.totalorder %s119, %s121
      %p125 = scmp.eq.s32.totalorder %s22, 0
      %p126 = por %p124, %p125
      %p127 = scmp.ne.s32.totalorder %s119, %s121
      %p128 = scmp.eq.s32.totalorder %s27, 1
      %p129 = por %p127, %p128
      %p130 = scmp.ne.s32.totalorder %s121, %s122
      %p131 = scmp.eq.s32.totalorder %s27, 0
      %p132 = por %p130, %p131
      %p133 = scmp.ne.s32.totalorder %s121, %s122
      %p134 = scmp.eq.s32.totalorder %s28, 1
      %p135 = por %p133, %p134
      %p137 = scmp.ne.s32.totalorder %s122, %s136
      %p138 = scmp.eq.s32.totalorder %s28, 0
      %p139 = por %p137, %p138
      %s141 = sadd.s32 %s140, 1
      %p144 = scmp.eq.s32.totalorder %s22, 1
      %p145 = scmp.ne.s32.totalorder %s140, %s142
      %p146 = scmp.eq.s32.totalorder %s22, 0
      %p147 = por %p145, %p146
      %p148 = scmp.ne.s32.totalorder %s140, %s142
      %p149 = scmp.eq.s32.totalorder %s27, 1
      %p150 = por %p148, %p149
      %p151 = scmp.ne.s32.totalorder %s142, %s143
      %p152 = scmp.eq.s32.totalorder %s27, 0
      %p153 = por %p151, %p152
      %p154 = scmp.ne.s32.totalorder %s142, %s143
      %p155 = scmp.eq.s32.totalorder %s28, 1
      %p156 = por %p154, %p155
      %p158 = scmp.ne.s32.totalorder %s143, %s157
      %p159 = scmp.eq.s32.totalorder %s28, 0
      %p160 = por %p158, %p159
      %s162 = sadd.s32 %s161, 1
      %p165 = scmp.eq.s32.totalorder %s22, 1
      %p166 = scmp.ne.s32.totalorder %s161, %s163
      %p167 = scmp.eq.s32.totalorder %s22, 0
      %p168 = por %p166, %p167
      %p169 = scmp.ne.s32.totalorder %s161, %s163
      %p170 = scmp.eq.s32.totalorder %s27, 1
      %p171 = por %p169, %p170
      %p172 = scmp.ne.s32.totalorder %s163, %s164
      %p173 = scmp.eq.s32.totalorder %s27, 0
      %p174 = por %p172, %p173
      %p175 = scmp.ne.s32.totalorder %s163, %s164
      %p176 = scmp.eq.s32.totalorder %s28, 1
      %p177 = por %p175, %p176
      %p179 = scmp.ne.s32.totalorder %s164, %s178
      %p180 = scmp.eq.s32.totalorder %s28, 0
      %p181 = por %p179, %p180
      %s182 = ssub.s32 %s22, %s29
      %p183 = scmp.eq.s32.totalorder %s182, 0
      %s185 = sadd.s32 %s184, 1
      %s186 = scalar_select %p183, %s184, %s185
      %p189 = pneg %p183
      %p190 = scmp.eq.s32.totalorder %s22, 1
      %p191 = por %p189, %p190
      %p192 = scmp.ne.s32.totalorder %s184, %s187
      %p193 = scmp.eq.s32.totalorder %s22, 0
      %p194 = por %p192, %p193
      %p195 = scmp.ne.s32.totalorder %s184, %s187
      %p196 = scmp.eq.s32.totalorder %s27, 1
      %p197 = por %p195, %p196
      %p198 = scmp.ne.s32.totalorder %s187, %s188
      %p199 = scmp.eq.s32.totalorder %s27, 0
      %p200 = por %p198, %p199
      %p201 = scmp.ne.s32.totalorder %s187, %s188
      %p202 = scmp.eq.s32.totalorder %s28, 1
      %p203 = por %p201, %p202
      %p205 = scmp.ne.s32.totalorder %s188, %s204
      %p206 = scmp.eq.s32.totalorder %s28, 0
      %p207 = por %p205, %p206
      %p208 = scmp.le.s32.totalorder 1, %s22
      %p209 = scmp.lt.s32.totalorder %s22, 3
      %p210 = pnand %p208, %p209
      %p211 = pneg %p210
      // Predicated region
      $region9: #{tpu_custom_call.1} parent=5 // pred_check
        _
      $region10: #{tpu_custom_call.1} parent=5 // pred_check_branch
        %213 = sbr.rel (%p210) target = $region12
      $region11: #{tpu_custom_call.1} parent=5 // pred_region
        %s214 = ssub.s32 %s22, 1
        // Predicated region
        $region13: #{tpu_custom_call.1} parent=11 // pred_check
          %p215 = pneg %p69
        $region14: #{tpu_custom_call.1} parent=11 // pred_check_branch
          %217 = sbr.rel (%p215) target = $region16
        $region15: #{tpu_custom_call.1} parent=11 // pred_region
          %219 = vsyncadd [#allocation6], 0
          %s220 = sshll.u32 %s1, 4
          %s221 = int_to_ptr.hbm [resolvable:$true] %s220
          %s222 = sshll.u32 [#allocation5], 4
          %s223 = int_to_ptr.vmem [resolvable:$true] %s222
          %228 = dma.hbm_to_vmem [thread:$0]  %s221, 256, %s223, [#allocation6], 128, 128, 8
        $region16: #{tpu_custom_call.1} parent=11 // pred_fallthru
          _
        // Predicated region
        $region17: #{tpu_custom_call.1} parent=11 // pred_check
          %p229 = pneg %p90
        $region18: #{tpu_custom_call.1} parent=11 // pred_check_branch
          %231 = sbr.rel (%p229) target = $region20
        $region19: #{tpu_custom_call.1} parent=11 // pred_region
          %233 = vsyncadd [#allocation6], 0
          %s235 = sshll.u32 %s2, 4
          %s236 = int_to_ptr.hbm [resolvable:$true] %s235
          %s237 = sshll.u32 [#allocation7], 4
          %s238 = int_to_ptr.vmem [resolvable:$true] %s237
          %240 = dma.hbm_to_vmem [thread:$0]  %s236, 32, %s238, [#allocation6]
        $region20: #{tpu_custom_call.1} parent=11 // pred_fallthru
          _
        // Predicated region
        $region21: #{tpu_custom_call.1} parent=11 // pred_check
          %p241 = pneg %p111
        $region22: #{tpu_custom_call.1} parent=11 // pred_check_branch
          %243 = sbr.rel (%p241) target = $region24
        $region23: #{tpu_custom_call.1} parent=11 // pred_region
          %245 = vsyncadd [#allocation9], 0
          %s246 = sshll.u32 %s3, 4
          %s247 = int_to_ptr.hbm [resolvable:$true] %s246
          %s248 = sshll.u32 [#allocation8], 4
          %s249 = int_to_ptr.vmem [resolvable:$true] %s248
          %254 = dma.hbm_to_vmem [thread:$0]  %s247, 28672, %s249, [#allocation9], 128, 128, 8
        $region24: #{tpu_custom_call.1} parent=11 // pred_fallthru
          _
        // Predicated region
        $region25: #{tpu_custom_call.1} parent=11 // pred_check
          %p255 = pneg %p132
        $region26: #{tpu_custom_call.1} parent=11 // pred_check_branch
          %257 = sbr.rel (%p255) target = $region28
        $region27: #{tpu_custom_call.1} parent=11 // pred_region
          %259 = vsyncadd [#allocation9], 0
          %s261 = sshll.u32 %s4, 4
          %s262 = int_to_ptr.hbm [resolvable:$true] %s261
          %s263 = sshll.u32 [#allocation10], 4
          %s264 = int_to_ptr.vmem [resolvable:$true] %s263
          %266 = dma.hbm_to_vmem [thread:$0]  %s262, 256, %s264, [#allocation9]
        $region28: #{tpu_custom_call.1} parent=11 // pred_fallthru
          _
        // Predicated region
        $region29: #{tpu_custom_call.1} parent=11 // pred_check
          %p267 = pneg %p153
        $region30: #{tpu_custom_call.1} parent=11 // pred_check_branch
          %269 = sbr.rel (%p267) target = $region32
        $region31: #{tpu_custom_call.1} parent=11 // pred_region
          %271 = vsyncadd [#allocation12], 0
          %s272 = sshll.u32 %s5, 4
          %s273 = int_to_ptr.hbm [resolvable:$true] %s272
          %s274 = sshll.u32 [#allocation11], 4
          %s275 = int_to_ptr.vmem [resolvable:$true] %s274
          %280 = dma.hbm_to_vmem [thread:$0]  %s273, 2048, %s275, [#allocation12], 64, 64, 4
        $region32: #{tpu_custom_call.1} parent=11 // pred_fallthru
          _
        // Predicated region
        $region33: #{tpu_custom_call.1} parent=11 // pred_check
          %p281 = pneg %p174
        $region34: #{tpu_custom_call.1} parent=11 // pred_check_branch
          %283 = sbr.rel (%p281) target = $region36
        $region35: #{tpu_custom_call.1} parent=11 // pred_region
          _
        $region36: #{tpu_custom_call.1} parent=11 // pred_fallthru
          _
      $region12: #{tpu_custom_call.1} parent=5 // pred_fallthru
        _
      %p284 = scmp.lt.s32.totalorder %s22, 2
      // Predicated region
      $region37: #{tpu_custom_call.1} parent=5 // pred_check
        %p285 = pneg %p284
      $region38: #{tpu_custom_call.1} parent=5 // pred_check_branch
        %287 = sbr.rel (%p285) target = $region40
      $region39: #{tpu_custom_call.1} parent=5 // pred_region
        // Predicated region
        $region41: #{tpu_custom_call.1} parent=39 // pred_check
          %p288 = pneg %p42
        $region42: #{tpu_custom_call.1} parent=39 // pred_check_branch
          %290 = sbr.rel (%p288) target = $region44
        $region43: #{tpu_custom_call.1} parent=39 // pred_region
          %s291 = sand.u32 %s32, 1
          %s292 = scalar_lea.sflag [#allocation3], %s291
          %s293 = sand.u32 %s32, 1
          %s294 = smul.addr %s293, 8
          %s295 = scalar_lea.vmem [#allocation2], %s294
          %297 = vsyncadd %s292, 0
          %s298 = smul.addr %s22, 8
          %s299 = scalar_lea.hbm %s0, %s298
          %s301 = sshll.u32 %s299, 4
          %s302 = int_to_ptr.hbm [resolvable:$true] %s301
          %s303 = sshll.u32 %s295, 4
          %s304 = int_to_ptr.vmem [resolvable:$true] %s303
          %306 = dma.hbm_to_vmem [thread:$0]  %s302, 128, %s304, %s292
        $region44: #{tpu_custom_call.1} parent=39 // pred_fallthru
          _
      $region40: #{tpu_custom_call.1} parent=5 // pred_fallthru
        _
      %p307 = scmp.le.s32.totalorder 1, %s22
      %p308 = scmp.lt.s32.totalorder %s22, 3
      %p309 = pnand %p307, %p308
      %p310 = pneg %p309
      // Predicated region
      $region45: #{tpu_custom_call.1} parent=5 // pred_check
        _
      $region46: #{tpu_custom_call.1} parent=5 // pred_check_branch
        %312 = sbr.rel (%p309) target = $region48
      $region47: #{tpu_custom_call.1} parent=5 // pred_region
        %s313 = ssub.s32 %s22, 1
        %s314 = sand.u32 %s35, 1
        %s315 = scalar_lea.sflag [#allocation3], %s314
        %s316 = sand.u32 %s35, 1
        %s317 = smul.addr %s316, 8
        %s318 = scalar_lea.vmem [#allocation2], %s317
        // Predicated region
        $region49: #{tpu_custom_call.1} parent=47 // pred_check
          %p319 = pneg %p48
        $region50: #{tpu_custom_call.1} parent=47 // pred_check_branch
          %321 = sbr.rel (%p319) target = $region52
        $region51: #{tpu_custom_call.1} parent=47 // pred_region
          %323 = dma.done %s315, 128
        $region52: #{tpu_custom_call.1} parent=47 // pred_fallthru
          _
        // Predicated region
        $region53: #{tpu_custom_call.1} parent=47 // pred_check
          %p324 = pneg %p69
        $region54: #{tpu_custom_call.1} parent=47 // pred_check_branch
          %326 = sbr.rel (%p324) target = $region56
        $region55: #{tpu_custom_call.1} parent=47 // pred_region
          %328 = dma.done [#allocation6], 256
        $region56: #{tpu_custom_call.1} parent=47 // pred_fallthru
          _
        // Predicated region
        $region57: #{tpu_custom_call.1} parent=47 // pred_check
          %p329 = pneg %p90
        $region58: #{tpu_custom_call.1} parent=47 // pred_check_branch
          %331 = sbr.rel (%p329) target = $region60
        $region59: #{tpu_custom_call.1} parent=47 // pred_region
          %333 = dma.done [#allocation6], 32
        $region60: #{tpu_custom_call.1} parent=47 // pred_fallthru
          _
        // Predicated region
        $region61: #{tpu_custom_call.1} parent=47 // pred_check
          %p334 = pneg %p111
        $region62: #{tpu_custom_call.1} parent=47 // pred_check_branch
          %336 = sbr.rel (%p334) target = $region64
        $region63: #{tpu_custom_call.1} parent=47 // pred_region
          %338 = dma.done [#allocation9], 28672
        $region64: #{tpu_custom_call.1} parent=47 // pred_fallthru
          _
        // Predicated region
        $region65: #{tpu_custom_call.1} parent=47 // pred_check
          %p339 = pneg %p132
        $region66: #{tpu_custom_call.1} parent=47 // pred_check_branch
          %341 = sbr.rel (%p339) target = $region68
        $region67: #{tpu_custom_call.1} parent=47 // pred_region
          %343 = dma.done [#allocation9], 256
        $region68: #{tpu_custom_call.1} parent=47 // pred_fallthru
          _
        // Predicated region
        $region69: #{tpu_custom_call.1} parent=47 // pred_check
          %p344 = pneg %p153
        $region70: #{tpu_custom_call.1} parent=47 // pred_check_branch
          %346 = sbr.rel (%p344) target = $region72
        $region71: #{tpu_custom_call.1} parent=47 // pred_region
          %348 = dma.done [#allocation12], 2048
        $region72: #{tpu_custom_call.1} parent=47 // pred_fallthru
          _
        %s349 = sand.u32 %s35, 1
        %s350 = scalar_lea.sflag [#allocation3], %s349
        %s351 = sand.u32 %s35, 1
        %s352 = smul.addr %s351, 8
        %s353 = scalar_lea.vmem [#allocation2], %s352
        %p354 = pneg %p48
        %p355 = pneg %p45
        %p356 = pneg %p69
        %p357 = pneg %p66
        %p358 = pneg %p90
        %p359 = pneg %p87
        %p360 = pneg %p111
        %p361 = pneg %p108
        %p362 = pneg %p132
        %p363 = pneg %p129
        %p364 = pneg %p153
        %p365 = pneg %p150
        %p366 = pneg %p174
        %p367 = pneg %p171
        %p368 = pneg %p200
        %p369 = pneg %p197
        %s370 = sand.u32 %s187, 1
        %s371 = scalar_lea.sflag [#allocation4], %s370
        %s372 = sand.u32 %s187, 1
        %s373 = smul.addr %s372, 8
        %s374 = scalar_lea.vmem [#allocation13], %s373
        %v376 = vld [vmem:[%s318] sm:$0xff]
        %v377 = vpack.c.bf16 %v376, %v376
        %v378 = vld [vmem:[#allocation5] sm:$0xff]
        %v379 = vld [vmem:[#allocation5 + $0x8] sm:$0xff]
        %v380 = vld [vmem:[#allocation7] sm:$0x3]
        %v382 = vperm.slane %v380, 0
        %v383 = vperm.slane %v380, 1
        %v388 = vunpack.c.l.b16 %v378
        %v389 = vunpack.c.h.b16 %v378
        %v390 = vunpack.c.l.b16 %v379
        %v391 = vunpack.c.h.b16 %v379
        %v392 = vpack.c.b16 %v390, %v388
        %v393 = vpack.c.b16 %v391, %v389
        %vm396 = vcmask 130048
        %v398 = vsel %vm396, %v377, 0
        %400 = vmatpush.bf16.msra.mxu0 0
        %401 = vmatpush.bf16.msra.mxu0 0
        %402 = vmatpush.bf16.msra.mxu0 0
        %403 = vmatpush.bf16.msra.mxu0 0
        %404 = vmatpush.bf16.msra.mxu0 0
        %405 = vmatpush.bf16.msra.mxu0 0
        %406 = vmatpush.bf16.msra.mxu0 0
        %407 = vmatpush.bf16.msra.mxu0 %v392
        %408 = vmatmul.bf16.gmra.mxu0 %v398
        %v409 = vpop.f32.mrf.mxu0
        %v410 = vadd.f32 %v382, %v409
        %v411 = vpop.f32.mrf.mxu0
        %412 = vdwg.mxu0
        %413 = vmatpush.bf16.msra.mxu0 0
        %414 = vmatpush.bf16.msra.mxu0 0
        %415 = vmatpush.bf16.msra.mxu0 0
        %416 = vmatpush.bf16.msra.mxu0 0
        %417 = vmatpush.bf16.msra.mxu0 0
        %418 = vmatpush.bf16.msra.mxu0 0
        %419 = vmatpush.bf16.msra.mxu0 0
        %420 = vmatpush.bf16.msra.mxu0 %v393
        %421 = vmatmul.bf16.gmra.mxu0 %v398
        %v422 = vpop.f32.mrf.mxu0
        %v423 = vadd.f32 %v383, %v422
        %v424 = vpop.f32.mrf.mxu0
        %425 = vdwg.mxu0
        %v426 = vmax.f32 %v410, 0.0
        %v427 = vmax.f32 %v423, 0.0
        %v428 = vpack.c.bf16 %v426, %v426
        %v429 = vpack.c.bf16 %v427, %v427
        %v430 = vld [vmem:[#allocation8] sm:$0xff]
        %v431 = vld [vmem:[#allocation8 + $0x8] sm:$0xff]
        %v432 = vld [vmem:[#allocation8 + $0x10] sm:$0xff]
        %v433 = vld [vmem:[#allocation8 + $0x18] sm:$0xff]
        %v434 = vld [vmem:[#allocation8 + $0x20] sm:$0xff]
        %v435 = vld [vmem:[#allocation8 + $0x28] sm:$0xff]
        %v436 = vld [vmem:[#allocation8 + $0x30] sm:$0xff]
        %v437 = vld [vmem:[#allocation8 + $0x38] sm:$0xff]
        %v438 = vld [vmem:[#allocation8 + $0x40] sm:$0xff]
        %v439 = vld [vmem:[#allocation8 + $0x48] sm:$0xff]
        %v440 = vld [vmem:[#allocation8 + $0x50] sm:$0xff]
        %v441 = vld [vmem:[#allocation8 + $0x58] sm:$0xff]
        %v442 = vld [vmem:[#allocation8 + $0x60] sm:$0xff]
        %v443 = vld [vmem:[#allocation8 + $0x68] sm:$0xff]
        %v444 = vld [vmem:[#allocation8 + $0x70] sm:$0xff]
        %v445 = vld [vmem:[#allocation8 + $0x78] sm:$0xff]
        %v446 = vld [vmem:[#allocation8 + $0x80] sm:$0xff]
        %v447 = vld [vmem:[#allocation8 + $0x88] sm:$0xff]
        %v448 = vld [vmem:[#allocation8 + $0x90] sm:$0xff]
        %v449 = vld [vmem:[#allocation8 + $0x98] sm:$0xff]
        %v450 = vld [vmem:[#allocation8 + $0xa0] sm:$0xff]
        %v451 = vld [vmem:[#allocation8 + $0xa8] sm:$0xff]
        %v452 = vld [vmem:[#allocation8 + $0xb0] sm:$0xff]
        %v453 = vld [vmem:[#allocation8 + $0xb8] sm:$0xff]
        %v454 = vld [vmem:[#allocation8 + $0xc0] sm:$0xff]
        %v455 = vld [vmem:[#allocation8 + $0xc8] sm:$0xff]
        %v456 = vld [vmem:[#allocation8 + $0xd0] sm:$0xff]
        %v457 = vld [vmem:[#allocation8 + $0xd8] sm:$0xff]
        %v458 = vld [vmem:[#allocation8 + $0xe0] sm:$0xff]
        %v459 = vld [vmem:[#allocation8 + $0xe8] sm:$0xff]
        %v460 = vld [vmem:[#allocation8 + $0xf0] sm:$0xff]
        %v461 = vld [vmem:[#allocation8 + $0xf8] sm:$0xff]
        %v462 = vld [vmem:[#allocation10] ss:$8 sm:$0x3]
        %v464 = vperm.slane %v462, 0
        %v465 = vperm.slane %v462, 1
        %v500 = vunpack.c.l.b16 %v430
        %v501 = vunpack.c.h.b16 %v430
        %v502 = vunpack.c.l.b16 %v431
        %v503 = vunpack.c.h.b16 %v431
        %v504 = vunpack.c.l.b16 %v432
        %v505 = vunpack.c.h.b16 %v432
        %v506 = vunpack.c.l.b16 %v433
        %v507 = vunpack.c.h.b16 %v433
        %v508 = vunpack.c.l.b16 %v434
        %v509 = vunpack.c.h.b16 %v434
        %v510 = vunpack.c.l.b16 %v435
        %v511 = vunpack.c.h.b16 %v435
        %v512 = vunpack.c.l.b16 %v436
        %v513 = vunpack.c.h.b16 %v436
        %v514 = vunpack.c.l.b16 %v437
        %v515 = vunpack.c.h.b16 %v437
        %v516 = vunpack.c.l.b16 %v438
        %v517 = vunpack.c.h.b16 %v438
        %v518 = vunpack.c.l.b16 %v439
        %v519 = vunpack.c.h.b16 %v439
        %v520 = vunpack.c.l.b16 %v440
        %v521 = vunpack.c.h.b16 %v440
        %v522 = vunpack.c.l.b16 %v441
        %v523 = vunpack.c.h.b16 %v441
        %v524 = vunpack.c.l.b16 %v442
        %v525 = vunpack.c.h.b16 %v442
        %v526 = vunpack.c.l.b16 %v443
        %v527 = vunpack.c.h.b16 %v443
        %v528 = vunpack.c.l.b16 %v444
        %v529 = vunpack.c.h.b16 %v444
        %v530 = vunpack.c.l.b16 %v445
        %v531 = vunpack.c.h.b16 %v445
        %v532 = vunpack.c.l.b16 %v446
        %v533 = vunpack.c.h.b16 %v446
        %v534 = vunpack.c.l.b16 %v447
        %v535 = vunpack.c.h.b16 %v447
        %v536 = vunpack.c.l.b16 %v448
        %v537 = vunpack.c.h.b16 %v448
        %v538 = vunpack.c.l.b16 %v449
        %v539 = vunpack.c.h.b16 %v449
        %v540 = vunpack.c.l.b16 %v450
        %v541 = vunpack.c.h.b16 %v450
        %v542 = vunpack.c.l.b16 %v451
        %v543 = vunpack.c.h.b16 %v451
        %v544 = vunpack.c.l.b16 %v452
        %v545 = vunpack.c.h.b16 %v452
        %v546 = vunpack.c.l.b16 %v453
        %v547 = vunpack.c.h.b16 %v453
        %v548 = vunpack.c.l.b16 %v454
        %v549 = vunpack.c.h.b16 %v454
        %v550 = vunpack.c.l.b16 %v455
        %v551 = vunpack.c.h.b16 %v455
        %v552 = vunpack.c.l.b16 %v456
        %v553 = vunpack.c.h.b16 %v456
        %v554 = vunpack.c.l.b16 %v457
        %v555 = vunpack.c.h.b16 %v457
        %v556 = vunpack.c.l.b16 %v458
        %v557 = vunpack.c.h.b16 %v458
        %v558 = vunpack.c.l.b16 %v459
        %v559 = vunpack.c.h.b16 %v459
        %v560 = vunpack.c.l.b16 %v460
        %v561 = vunpack.c.h.b16 %v460
        %v562 = vunpack.c.l.b16 %v461
        %v563 = vunpack.c.h.b16 %v461
        %v564 = vpack.c.b16 %v502, %v500
        %v565 = vpack.c.b16 %v503, %v501
        %v566 = vpack.c.b16 %v506, %v504
        %v567 = vpack.c.b16 %v507, %v505
        %v568 = vpack.c.b16 %v510, %v508
        %v569 = vpack.c.b16 %v511, %v509
        %v570 = vpack.c.b16 %v514, %v512
        %v571 = vpack.c.b16 %v515, %v513
        %v572 = vpack.c.b16 %v518, %v516
        %v573 = vpack.c.b16 %v519, %v517
        %v574 = vpack.c.b16 %v522, %v520
        %v575 = vpack.c.b16 %v523, %v521
        %v576 = vpack.c.b16 %v526, %v524
        %v577 = vpack.c.b16 %v527, %v525
        %v578 = vpack.c.b16 %v530, %v528
        %v579 = vpack.c.b16 %v531, %v529
        %v580 = vpack.c.b16 %v534, %v532
        %v581 = vpack.c.b16 %v535, %v533
        %v582 = vpack.c.b16 %v538, %v536
        %v583 = vpack.c.b16 %v539, %v537
        %v584 = vpack.c.b16 %v542, %v540
        %v585 = vpack.c.b16 %v543, %v541
        %v586 = vpack.c.b16 %v546, %v544
        %v587 = vpack.c.b16 %v547, %v545
        %v588 = vpack.c.b16 %v550, %v548
        %v589 = vpack.c.b16 %v551, %v549
        %v590 = vpack.c.b16 %v554, %v552
        %v591 = vpack.c.b16 %v555, %v553
        %v592 = vpack.c.b16 %v558, %v556
        %v593 = vpack.c.b16 %v559, %v557
        %v594 = vpack.c.b16 %v562, %v560
        %v595 = vpack.c.b16 %v563, %v561
        %628 = vmatpush.bf16.msra.mxu0 %v578
        %629 = vmatpush.bf16.msra.mxu0 %v576
        %630 = vmatpush.bf16.msra.mxu0 %v574
        %631 = vmatpush.bf16.msra.mxu0 %v572
        %632 = vmatpush.bf16.msra.mxu0 %v570
        %633 = vmatpush.bf16.msra.mxu0 %v568
        %634 = vmatpush.bf16.msra.mxu0 %v566
        %635 = vmatpush.bf16.msra.mxu0 %v564
        %636 = vmatmul.bf16.gmra.mxu0 %v428
        %v637 = vpop.f32.mrf.mxu0
        %v638 = vadd.f32 %v464, %v637
        %v639 = vpop.f32.mrf.mxu0
        %640 = vdwg.mxu0
        %641 = vmatpush.bf16.msra.mxu0 %v594
        %642 = vmatpush.bf16.msra.mxu0 %v592
        %643 = vmatpush.bf16.msra.mxu0 %v590
        %644 = vmatpush.bf16.msra.mxu0 %v588
        %645 = vmatpush.bf16.msra.mxu0 %v586
        %646 = vmatpush.bf16.msra.mxu0 %v584
        %647 = vmatpush.bf16.msra.mxu0 %v582
        %648 = vmatpush.bf16.msra.mxu0 %v580
        %649 = vmatmul.bf16.gmra.mxu0 %v429
        %v650 = vpop.f32.mrf.mxu0
        %v651 = vadd.f32 %v638, %v650
        %v652 = vpop.f32.mrf.mxu0
        %653 = vdwg.mxu0
        %654 = vmatpush.bf16.msra.mxu0 %v579
        %655 = vmatpush.bf16.msra.mxu0 %v577
        %656 = vmatpush.bf16.msra.mxu0 %v575
        %657 = vmatpush.bf16.msra.mxu0 %v573
        %658 = vmatpush.bf16.msra.mxu0 %v571
        %659 = vmatpush.bf16.msra.mxu0 %v569
        %660 = vmatpush.bf16.msra.mxu0 %v567
        %661 = vmatpush.bf16.msra.mxu0 %v565
        %662 = vmatmul.bf16.gmra.mxu0 %v428
        %v663 = vpop.f32.mrf.mxu0
        %v664 = vadd.f32 %v465, %v663
        %v665 = vpop.f32.mrf.mxu0
        %666 = vdwg.mxu0
        %667 = vmatpush.bf16.msra.mxu0 %v595
        %668 = vmatpush.bf16.msra.mxu0 %v593
        %669 = vmatpush.bf16.msra.mxu0 %v591
        %670 = vmatpush.bf16.msra.mxu0 %v589
        %671 = vmatpush.bf16.msra.mxu0 %v587
        %672 = vmatpush.bf16.msra.mxu0 %v585
        %673 = vmatpush.bf16.msra.mxu0 %v583
        %674 = vmatpush.bf16.msra.mxu0 %v581
        %675 = vmatmul.bf16.gmra.mxu0 %v429
        %v676 = vpop.f32.mrf.mxu0
        %v677 = vadd.f32 %v664, %v676
        %v678 = vpop.f32.mrf.mxu0
        %679 = vdwg.mxu0
        %v680 = vmax.f32 %v651, 0.0
        %v681 = vmax.f32 %v677, 0.0
        %v682 = vpack.c.bf16 %v680, %v680
        %v683 = vpack.c.bf16 %v681, %v681
        %s684 = scalar_lea.vmem [#allocation8], 256
        %v685 = vld [vmem:[%s684] sm:$0xff]
        %v686 = vld [vmem:[%s684 + $0x8] sm:$0xff]
        %v687 = vld [vmem:[%s684 + $0x10] sm:$0xff]
        %v688 = vld [vmem:[%s684 + $0x18] sm:$0xff]
        %v689 = vld [vmem:[%s684 + $0x20] sm:$0xff]
        %v690 = vld [vmem:[%s684 + $0x28] sm:$0xff]
        %v691 = vld [vmem:[%s684 + $0x30] sm:$0xff]
        %v692 = vld [vmem:[%s684 + $0x38] sm:$0xff]
        %v693 = vld [vmem:[%s684 + $0x40] sm:$0xff]
        %v694 = vld [vmem:[%s684 + $0x48] sm:$0xff]
        %v695 = vld [vmem:[%s684 + $0x50] sm:$0xff]
        %v696 = vld [vmem:[%s684 + $0x58] sm:$0xff]
        %v697 = vld [vmem:[%s684 + $0x60] sm:$0xff]
        %v698 = vld [vmem:[%s684 + $0x68] sm:$0xff]
        %v699 = vld [vmem:[%s684 + $0x70] sm:$0xff]
        %v700 = vld [vmem:[%s684 + $0x78] sm:$0xff]
        %v701 = vld [vmem:[%s684 + $0x80] sm:$0xff]
        %v702 = vld [vmem:[%s684 + $0x88] sm:$0xff]
        %v703 = vld [vmem:[%s684 + $0x90] sm:$0xff]
        %v704 = vld [vmem:[%s684 + $0x98] sm:$0xff]
        %v705 = vld [vmem:[%s684 + $0xa0] sm:$0xff]
        %v706 = vld [vmem:[%s684 + $0xa8] sm:$0xff]
        %v707 = vld [vmem:[%s684 + $0xb0] sm:$0xff]
        %v708 = vld [vmem:[%s684 + $0xb8] sm:$0xff]
        %v709 = vld [vmem:[%s684 + $0xc0] sm:$0xff]
        %v710 = vld [vmem:[%s684 + $0xc8] sm:$0xff]
        %v711 = vld [vmem:[%s684 + $0xd0] sm:$0xff]
        %v712 = vld [vmem:[%s684 + $0xd8] sm:$0xff]
        %v713 = vld [vmem:[%s684 + $0xe0] sm:$0xff]
        %v714 = vld [vmem:[%s684 + $0xe8] sm:$0xff]
        %v715 = vld [vmem:[%s684 + $0xf0] sm:$0xff]
        %v716 = vld [vmem:[%s684 + $0xf8] sm:$0xff]
        %s717 = scalar_lea.vmem [#allocation10], 1
        %v718 = vld [vmem:[%s717] ss:$8 sm:$0x3]
        %v720 = vperm.slane %v718, 0
        %v721 = vperm.slane %v718, 1
        %v756 = vunpack.c.l.b16 %v685
        %v757 = vunpack.c.h.b16 %v685
        %v758 = vunpack.c.l.b16 %v686
        %v759 = vunpack.c.h.b16 %v686
        %v760 = vunpack.c.l.b16 %v687
        %v761 = vunpack.c.h.b16 %v687
        %v762 = vunpack.c.l.b16 %v688
        %v763 = vunpack.c.h.b16 %v688
        %v764 = vunpack.c.l.b16 %v689
        %v765 = vunpack.c.h.b16 %v689
        %v766 = vunpack.c.l.b16 %v690
        %v767 = vunpack.c.h.b16 %v690
        %v768 = vunpack.c.l.b16 %v691
        %v769 = vunpack.c.h.b16 %v691
        %v770 = vunpack.c.l.b16 %v692
        %v771 = vunpack.c.h.b16 %v692
        %v772 = vunpack.c.l.b16 %v693
        %v773 = vunpack.c.h.b16 %v693
        %v774 = vunpack.c.l.b16 %v694
        %v775 = vunpack.c.h.b16 %v694
        %v776 = vunpack.c.l.b16 %v695
        %v777 = vunpack.c.h.b16 %v695
        %v778 = vunpack.c.l.b16 %v696
        %v779 = vunpack.c.h.b16 %v696
        %v780 = vunpack.c.l.b16 %v697
        %v781 = vunpack.c.h.b16 %v697
        %v782 = vunpack.c.l.b16 %v698
        %v783 = vunpack.c.h.b16 %v698
        %v784 = vunpack.c.l.b16 %v699
        %v785 = vunpack.c.h.b16 %v699
        %v786 = vunpack.c.l.b16 %v700
        %v787 = vunpack.c.h.b16 %v700
        %v788 = vunpack.c.l.b16 %v701
        %v789 = vunpack.c.h.b16 %v701
        %v790 = vunpack.c.l.b16 %v702
        %v791 = vunpack.c.h.b16 %v702
        %v792 = vunpack.c.l.b16 %v703
        %v793 = vunpack.c.h.b16 %v703
        %v794 = vunpack.c.l.b16 %v704
        %v795 = vunpack.c.h.b16 %v704
        %v796 = vunpack.c.l.b16 %v705
        %v797 = vunpack.c.h.b16 %v705
        %v798 = vunpack.c.l.b16 %v706
        %v799 = vunpack.c.h.b16 %v706
        %v800 = vunpack.c.l.b16 %v707
        %v801 = vunpack.c.h.b16 %v707
        %v802 = vunpack.c.l.b16 %v708
        %v803 = vunpack.c.h.b16 %v708
        %v804 = vunpack.c.l.b16 %v709
        %v805 = vunpack.c.h.b16 %v709
        %v806 = vunpack.c.l.b16 %v710
        %v807 = vunpack.c.h.b16 %v710
        %v808 = vunpack.c.l.b16 %v711
        %v809 = vunpack.c.h.b16 %v711
        %v810 = vunpack.c.l.b16 %v712
        %v811 = vunpack.c.h.b16 %v712
        %v812 = vunpack.c.l.b16 %v713
        %v813 = vunpack.c.h.b16 %v713
        %v814 = vunpack.c.l.b16 %v714
        %v815 = vunpack.c.h.b16 %v714
        %v816 = vunpack.c.l.b16 %v715
        %v817 = vunpack.c.h.b16 %v715
        %v818 = vunpack.c.l.b16 %v716
        %v819 = vunpack.c.h.b16 %v716
        %v820 = vpack.c.b16 %v758, %v756
        %v821 = vpack.c.b16 %v759, %v757
        %v822 = vpack.c.b16 %v762, %v760
        %v823 = vpack.c.b16 %v763, %v761
        %v824 = vpack.c.b16 %v766, %v764
        %v825 = vpack.c.b16 %v767, %v765
        %v826 = vpack.c.b16 %v770, %v768
        %v827 = vpack.c.b16 %v771, %v769
        %v828 = vpack.c.b16 %v774, %v772
        %v829 = vpack.c.b16 %v775, %v773
        %v830 = vpack.c.b16 %v778, %v776
        %v831 = vpack.c.b16 %v779, %v777
        %v832 = vpack.c.b16 %v782, %v780
        %v833 = vpack.c.b16 %v783, %v781
        %v834 = vpack.c.b16 %v786, %v784
        %v835 = vpack.c.b16 %v787, %v785
        %v836 = vpack.c.b16 %v790, %v788
        %v837 = vpack.c.b16 %v791, %v789
        %v838 = vpack.c.b16 %v794, %v792
        %v839 = vpack.c.b16 %v795, %v793
        %v840 = vpack.c.b16 %v798, %v796
        %v841 = vpack.c.b16 %v799, %v797
        %v842 = vpack.c.b16 %v802, %v800
        %v843 = vpack.c.b16 %v803, %v801
        %v844 = vpack.c.b16 %v806, %v804
        %v845 = vpack.c.b16 %v807, %v805
        %v846 = vpack.c.b16 %v810, %v808
        %v847 = vpack.c.b16 %v811, %v809
        %v848 = vpack.c.b16 %v814, %v812
        %v849 = vpack.c.b16 %v815, %v813
        %v850 = vpack.c.b16 %v818, %v816
        %v851 = vpack.c.b16 %v819, %v817
        %884 = vmatpush.bf16.msra.mxu0 %v834
        %885 = vmatpush.bf16.msra.mxu0 %v832
        %886 = vmatpush.bf16.msra.mxu0 %v830
        %887 = vmatpush.bf16.msra.mxu0 %v828
        %888 = vmatpush.bf16.msra.mxu0 %v826
        %889 = vmatpush.bf16.msra.mxu0 %v824
        %890 = vmatpush.bf16.msra.mxu0 %v822
        %891 = vmatpush.bf16.msra.mxu0 %v820
        %892 = vmatmul.bf16.gmra.mxu0 %v682
        %v893 = vpop.f32.mrf.mxu0
        %v894 = vadd.f32 %v720, %v893
        %v895 = vpop.f32.mrf.mxu0
        %896 = vdwg.mxu0
        %897 = vmatpush.bf16.msra.mxu0 %v850
        %898 = vmatpush.bf16.msra.mxu0 %v848
        %899 = vmatpush.bf16.msra.mxu0 %v846
        %900 = vmatpush.bf16.msra.mxu0 %v844
        %901 = vmatpush.bf16.msra.mxu0 %v842
        %902 = vmatpush.bf16.msra.mxu0 %v840
        %903 = vmatpush.bf16.msra.mxu0 %v838
        %904 = vmatpush.bf16.msra.mxu0 %v836
        %905 = vmatmul.bf16.gmra.mxu0 %v683
        %v906 = vpop.f32.mrf.mxu0
        %v907 = vadd.f32 %v894, %v906
        %v908 = vpop.f32.mrf.mxu0
        %909 = vdwg.mxu0
        %910 = vmatpush.bf16.msra.mxu0 %v835
        %911 = vmatpush.bf16.msra.mxu0 %v833
        %912 = vmatpush.bf16.msra.mxu0 %v831
        %913 = vmatpush.bf16.msra.mxu0 %v829
        %914 = vmatpush.bf16.msra.mxu0 %v827
        %915 = vmatpush.bf16.msra.mxu0 %v825
        %916 = vmatpush.bf16.msra.mxu0 %v823
        %917 = vmatpush.bf16.msra.mxu0 %v821
        %918 = vmatmul.bf16.gmra.mxu0 %v682
        %v919 = vpop.f32.mrf.mxu0
        %v920 = vadd.f32 %v721, %v919
        %v921 = vpop.f32.mrf.mxu0
        %922 = vdwg.mxu0
        %923 = vmatpush.bf16.msra.mxu0 %v851
        %924 = vmatpush.bf16.msra.mxu0 %v849
        %925 = vmatpush.bf16.msra.mxu0 %v847
        %926 = vmatpush.bf16.msra.mxu0 %v845
        %927 = vmatpush.bf16.msra.mxu0 %v843
        %928 = vmatpush.bf16.msra.mxu0 %v841
        %929 = vmatpush.bf16.msra.mxu0 %v839
        %930 = vmatpush.bf16.msra.mxu0 %v837
        %931 = vmatmul.bf16.gmra.mxu0 %v683
        %v932 = vpop.f32.mrf.mxu0
        %v933 = vadd.f32 %v920, %v932
        %v934 = vpop.f32.mrf.mxu0
        %935 = vdwg.mxu0
        %v936 = vmax.f32 %v907, 0.0
        %v937 = vmax.f32 %v933, 0.0
        %v938 = vpack.c.bf16 %v936, %v936
        %v939 = vpack.c.bf16 %v937, %v937
        %s940 = scalar_lea.vmem [#allocation8], 512
        %v941 = vld [vmem:[%s940] sm:$0xff]
        %v942 = vld [vmem:[%s940 + $0x8] sm:$0xff]
        %v943 = vld [vmem:[%s940 + $0x10] sm:$0xff]
        %v944 = vld [vmem:[%s940 + $0x18] sm:$0xff]
        %v945 = vld [vmem:[%s940 + $0x20] sm:$0xff]
        %v946 = vld [vmem:[%s940 + $0x28] sm:$0xff]
        %v947 = vld [vmem:[%s940 + $0x30] sm:$0xff]
        %v948 = vld [vmem:[%s940 + $0x38] sm:$0xff]
        %v949 = vld [vmem:[%s940 + $0x40] sm:$0xff]
        %v950 = vld [vmem:[%s940 + $0x48] sm:$0xff]
        %v951 = vld [vmem:[%s940 + $0x50] sm:$0xff]
        %v952 = vld [vmem:[%s940 + $0x58] sm:$0xff]
        %v953 = vld [vmem:[%s940 + $0x60] sm:$0xff]
        %v954 = vld [vmem:[%s940 + $0x68] sm:$0xff]
        %v955 = vld [vmem:[%s940 + $0x70] sm:$0xff]
        %v956 = vld [vmem:[%s940 + $0x78] sm:$0xff]
        %v957 = vld [vmem:[%s940 + $0x80] sm:$0xff]
        %v958 = vld [vmem:[%s940 + $0x88] sm:$0xff]
        %v959 = vld [vmem:[%s940 + $0x90] sm:$0xff]
        %v960 = vld [vmem:[%s940 + $0x98] sm:$0xff]
        %v961 = vld [vmem:[%s940 + $0xa0] sm:$0xff]
        %v962 = vld [vmem:[%s940 + $0xa8] sm:$0xff]
        %v963 = vld [vmem:[%s940 + $0xb0] sm:$0xff]
        %v964 = vld [vmem:[%s940 + $0xb8] sm:$0xff]
        %v965 = vld [vmem:[%s940 + $0xc0] sm:$0xff]
        %v966 = vld [vmem:[%s940 + $0xc8] sm:$0xff]
        %v967 = vld [vmem:[%s940 + $0xd0] sm:$0xff]
        %v968 = vld [vmem:[%s940 + $0xd8] sm:$0xff]
        %v969 = vld [vmem:[%s940 + $0xe0] sm:$0xff]
        %v970 = vld [vmem:[%s940 + $0xe8] sm:$0xff]
        %v971 = vld [vmem:[%s940 + $0xf0] sm:$0xff]
        %v972 = vld [vmem:[%s940 + $0xf8] sm:$0xff]
        %s973 = scalar_lea.vmem [#allocation10], 2
        %v974 = vld [vmem:[%s973] ss:$8 sm:$0x3]
        %v976 = vperm.slane %v974, 0
        %v977 = vperm.slane %v974, 1
        %v1012 = vunpack.c.l.b16 %v941
        %v1013 = vunpack.c.h.b16 %v941
        %v1014 = vunpack.c.l.b16 %v942
        %v1015 = vunpack.c.h.b16 %v942
        %v1016 = vunpack.c.l.b16 %v943
        %v1017 = vunpack.c.h.b16 %v943
        %v1018 = vunpack.c.l.b16 %v944
        %v1019 = vunpack.c.h.b16 %v944
        %v1020 = vunpack.c.l.b16 %v945
        %v1021 = vunpack.c.h.b16 %v945
        %v1022 = vunpack.c.l.b16 %v946
        %v1023 = vunpack.c.h.b16 %v946
        %v1024 = vunpack.c.l.b16 %v947
        %v1025 = vunpack.c.h.b16 %v947
        %v1026 = vunpack.c.l.b16 %v948
        %v1027 = vunpack.c.h.b16 %v948
        %v1028 = vunpack.c.l.b16 %v949
        %v1029 = vunpack.c.h.b16 %v949
        %v1030 = vunpack.c.l.b16 %v950
        %v1031 = vunpack.c.h.b16 %v950
        %v1032 = vunpack.c.l.b16 %v951
        %v1033 = vunpack.c.h.b16 %v951
        %v1034 = vunpack.c.l.b16 %v952
        %v1035 = vunpack.c.h.b16 %v952
        %v1036 = vunpack.c.l.b16 %v953
        %v1037 = vunpack.c.h.b16 %v953
        %v1038 = vunpack.c.l.b16 %v954
        %v1039 = vunpack.c.h.b16 %v954
        %v1040 = vunpack.c.l.b16 %v955
        %v1041 = vunpack.c.h.b16 %v955
        %v1042 = vunpack.c.l.b16 %v956
        %v1043 = vunpack.c.h.b16 %v956
        %v1044 = vunpack.c.l.b16 %v957
        %v1045 = vunpack.c.h.b16 %v957
        %v1046 = vunpack.c.l.b16 %v958
        %v1047 = vunpack.c.h.b16 %v958
        %v1048 = vunpack.c.l.b16 %v959
        %v1049 = vunpack.c.h.b16 %v959
        %v1050 = vunpack.c.l.b16 %v960
        %v1051 = vunpack.c.h.b16 %v960
        %v1052 = vunpack.c.l.b16 %v961
        %v1053 = vunpack.c.h.b16 %v961
        %v1054 = vunpack.c.l.b16 %v962
        %v1055 = vunpack.c.h.b16 %v962
        %v1056 = vunpack.c.l.b16 %v963
        %v1057 = vunpack.c.h.b16 %v963
        %v1058 = vunpack.c.l.b16 %v964
        %v1059 = vunpack.c.h.b16 %v964
        %v1060 = vunpack.c.l.b16 %v965
        %v1061 = vunpack.c.h.b16 %v965
        %v1062 = vunpack.c.l.b16 %v966
        %v1063 = vunpack.c.h.b16 %v966
        %v1064 = vunpack.c.l.b16 %v967
        %v1065 = vunpack.c.h.b16 %v967
        %v1066 = vunpack.c.l.b16 %v968
        %v1067 = vunpack.c.h.b16 %v968
        %v1068 = vunpack.c.l.b16 %v969
        %v1069 = vunpack.c.h.b16 %v969
        %v1070 = vunpack.c.l.b16 %v970
        %v1071 = vunpack.c.h.b16 %v970
        %v1072 = vunpack.c.l.b16 %v971
        %v1073 = vunpack.c.h.b16 %v971
        %v1074 = vunpack.c.l.b16 %v972
        %v1075 = vunpack.c.h.b16 %v972
        %v1076 = vpack.c.b16 %v1014, %v1012
        %v1077 = vpack.c.b16 %v1015, %v1013
        %v1078 = vpack.c.b16 %v1018, %v1016
        %v1079 = vpack.c.b16 %v1019, %v1017
        %v1080 = vpack.c.b16 %v1022, %v1020
        %v1081 = vpack.c.b16 %v1023, %v1021
        %v1082 = vpack.c.b16 %v1026, %v1024
        %v1083 = vpack.c.b16 %v1027, %v1025
        %v1084 = vpack.c.b16 %v1030, %v1028
        %v1085 = vpack.c.b16 %v1031, %v1029
        %v1086 = vpack.c.b16 %v1034, %v1032
        %v1087 = vpack.c.b16 %v1035, %v1033
        %v1088 = vpack.c.b16 %v1038, %v1036
        %v1089 = vpack.c.b16 %v1039, %v1037
        %v1090 = vpack.c.b16 %v1042, %v1040
        %v1091 = vpack.c.b16 %v1043, %v1041
        %v1092 = vpack.c.b16 %v1046, %v1044
        %v1093 = vpack.c.b16 %v1047, %v1045
        %v1094 = vpack.c.b16 %v1050, %v1048
        %v1095 = vpack.c.b16 %v1051, %v1049
        %v1096 = vpack.c.b16 %v1054, %v1052
        %v1097 = vpack.c.b16 %v1055, %v1053
        %v1098 = vpack.c.b16 %v1058, %v1056
        %v1099 = vpack.c.b16 %v1059, %v1057
        %v1100 = vpack.c.b16 %v1062, %v1060
        %v1101 = vpack.c.b16 %v1063, %v1061
        %v1102 = vpack.c.b16 %v1066, %v1064
        %v1103 = vpack.c.b16 %v1067, %v1065
        %v1104 = vpack.c.b16 %v1070, %v1068
        %v1105 = vpack.c.b16 %v1071, %v1069
        %v1106 = vpack.c.b16 %v1074, %v1072
        %v1107 = vpack.c.b16 %v1075, %v1073
        %1140 = vmatpush.bf16.msra.mxu0 %v1090
        %1141 = vmatpush.bf16.msra.mxu0 %v1088
        %1142 = vmatpush.bf16.msra.mxu0 %v1086
        %1143 = vmatpush.bf16.msra.mxu0 %v1084
        %1144 = vmatpush.bf16.msra.mxu0 %v1082
        %1145 = vmatpush.bf16.msra.mxu0 %v1080
        %1146 = vmatpush.bf16.msra.mxu0 %v1078
        %1147 = vmatpush.bf16.msra.mxu0 %v1076
        %1148 = vmatmul.bf16.gmra.mxu0 %v938
        %v1149 = vpop.f32.mrf.mxu0
        %v1150 = vadd.f32 %v976, %v1149
        %v1151 = vpop.f32.mrf.mxu0
        %1152 = vdwg.mxu0
        %1153 = vmatpush.bf16.msra.mxu0 %v1106
        %1154 = vmatpush.bf16.msra.mxu0 %v1104
        %1155 = vmatpush.bf16.msra.mxu0 %v1102
        %1156 = vmatpush.bf16.msra.mxu0 %v1100
        %1157 = vmatpush.bf16.msra.mxu0 %v1098
        %1158 = vmatpush.bf16.msra.mxu0 %v1096
        %1159 = vmatpush.bf16.msra.mxu0 %v1094
        %1160 = vmatpush.bf16.msra.mxu0 %v1092
        %1161 = vmatmul.bf16.gmra.mxu0 %v939
        %v1162 = vpop.f32.mrf.mxu0
        %v1163 = vadd.f32 %v1150, %v1162
        %v1164 = vpop.f32.mrf.mxu0
        %1165 = vdwg.mxu0
        %1166 = vmatpush.bf16.msra.mxu0 %v1091
        %1167 = vmatpush.bf16.msra.mxu0 %v1089
        %1168 = vmatpush.bf16.msra.mxu0 %v1087
        %1169 = vmatpush.bf16.msra.mxu0 %v1085
        %1170 = vmatpush.bf16.msra.mxu0 %v1083
        %1171 = vmatpush.bf16.msra.mxu0 %v1081
        %1172 = vmatpush.bf16.msra.mxu0 %v1079
        %1173 = vmatpush.bf16.msra.mxu0 %v1077
        %1174 = vmatmul.bf16.gmra.mxu0 %v938
        %v1175 = vpop.f32.mrf.mxu0
        %v1176 = vadd.f32 %v977, %v1175
        %v1177 = vpop.f32.mrf.mxu0
        %1178 = vdwg.mxu0
        %1179 = vmatpush.bf16.msra.mxu0 %v1107
        %1180 = vmatpush.bf16.msra.mxu0 %v1105
        %1181 = vmatpush.bf16.msra.mxu0 %v1103
        %1182 = vmatpush.bf16.msra.mxu0 %v1101
        %1183 = vmatpush.bf16.msra.mxu0 %v1099
        %1184 = vmatpush.bf16.msra.mxu0 %v1097
        %1185 = vmatpush.bf16.msra.mxu0 %v1095
        %1186 = vmatpush.bf16.msra.mxu0 %v1093
        %1187 = vmatmul.bf16.gmra.mxu0 %v939
        %v1188 = vpop.f32.mrf.mxu0
        %v1189 = vadd.f32 %v1176, %v1188
        %v1190 = vpop.f32.mrf.mxu0
        %1191 = vdwg.mxu0
        %v1192 = vmax.f32 %v1163, 0.0
        %v1193 = vmax.f32 %v1189, 0.0
        %v1194 = vpack.c.bf16 %v1192, %v1192
        %v1195 = vpack.c.bf16 %v1193, %v1193
        %s1196 = scalar_lea.vmem [#allocation8], 768
        %v1197 = vld [vmem:[%s1196] sm:$0xff]
        %v1198 = vld [vmem:[%s1196 + $0x8] sm:$0xff]
        %v1199 = vld [vmem:[%s1196 + $0x10] sm:$0xff]
        %v1200 = vld [vmem:[%s1196 + $0x18] sm:$0xff]
        %v1201 = vld [vmem:[%s1196 + $0x20] sm:$0xff]
        %v1202 = vld [vmem:[%s1196 + $0x28] sm:$0xff]
        %v1203 = vld [vmem:[%s1196 + $0x30] sm:$0xff]
        %v1204 = vld [vmem:[%s1196 + $0x38] sm:$0xff]
        %v1205 = vld [vmem:[%s1196 + $0x40] sm:$0xff]
        %v1206 = vld [vmem:[%s1196 + $0x48] sm:$0xff]
        %v1207 = vld [vmem:[%s1196 + $0x50] sm:$0xff]
        %v1208 = vld [vmem:[%s1196 + $0x58] sm:$0xff]
        %v1209 = vld [vmem:[%s1196 + $0x60] sm:$0xff]
        %v1210 = vld [vmem:[%s1196 + $0x68] sm:$0xff]
        %v1211 = vld [vmem:[%s1196 + $0x70] sm:$0xff]
        %v1212 = vld [vmem:[%s1196 + $0x78] sm:$0xff]
        %v1213 = vld [vmem:[%s1196 + $0x80] sm:$0xff]
        %v1214 = vld [vmem:[%s1196 + $0x88] sm:$0xff]
        %v1215 = vld [vmem:[%s1196 + $0x90] sm:$0xff]
        %v1216 = vld [vmem:[%s1196 + $0x98] sm:$0xff]
        %v1217 = vld [vmem:[%s1196 + $0xa0] sm:$0xff]
        %v1218 = vld [vmem:[%s1196 + $0xa8] sm:$0xff]
        %v1219 = vld [vmem:[%s1196 + $0xb0] sm:$0xff]
        %v1220 = vld [vmem:[%s1196 + $0xb8] sm:$0xff]
        %v1221 = vld [vmem:[%s1196 + $0xc0] sm:$0xff]
        %v1222 = vld [vmem:[%s1196 + $0xc8] sm:$0xff]
        %v1223 = vld [vmem:[%s1196 + $0xd0] sm:$0xff]
        %v1224 = vld [vmem:[%s1196 + $0xd8] sm:$0xff]
        %v1225 = vld [vmem:[%s1196 + $0xe0] sm:$0xff]
        %v1226 = vld [vmem:[%s1196 + $0xe8] sm:$0xff]
        %v1227 = vld [vmem:[%s1196 + $0xf0] sm:$0xff]
        %v1228 = vld [vmem:[%s1196 + $0xf8] sm:$0xff]
        %s1229 = scalar_lea.vmem [#allocation10], 3
        %v1230 = vld [vmem:[%s1229] ss:$8 sm:$0x3]
        %v1232 = vperm.slane %v1230, 0
        %v1233 = vperm.slane %v1230, 1
        %v1268 = vunpack.c.l.b16 %v1197
        %v1269 = vunpack.c.h.b16 %v1197
        %v1270 = vunpack.c.l.b16 %v1198
        %v1271 = vunpack.c.h.b16 %v1198
        %v1272 = vunpack.c.l.b16 %v1199
        %v1273 = vunpack.c.h.b16 %v1199
        %v1274 = vunpack.c.l.b16 %v1200
        %v1275 = vunpack.c.h.b16 %v1200
        %v1276 = vunpack.c.l.b16 %v1201
        %v1277 = vunpack.c.h.b16 %v1201
        %v1278 = vunpack.c.l.b16 %v1202
        %v1279 = vunpack.c.h.b16 %v1202
        %v1280 = vunpack.c.l.b16 %v1203
        %v1281 = vunpack.c.h.b16 %v1203
        %v1282 = vunpack.c.l.b16 %v1204
        %v1283 = vunpack.c.h.b16 %v1204
        %v1284 = vunpack.c.l.b16 %v1205
        %v1285 = vunpack.c.h.b16 %v1205
        %v1286 = vunpack.c.l.b16 %v1206
        %v1287 = vunpack.c.h.b16 %v1206
        %v1288 = vunpack.c.l.b16 %v1207
        %v1289 = vunpack.c.h.b16 %v1207
        %v1290 = vunpack.c.l.b16 %v1208
        %v1291 = vunpack.c.h.b16 %v1208
        %v1292 = vunpack.c.l.b16 %v1209
        %v1293 = vunpack.c.h.b16 %v1209
        %v1294 = vunpack.c.l.b16 %v1210
        %v1295 = vunpack.c.h.b16 %v1210
        %v1296 = vunpack.c.l.b16 %v1211
        %v1297 = vunpack.c.h.b16 %v1211
        %v1298 = vunpack.c.l.b16 %v1212
        %v1299 = vunpack.c.h.b16 %v1212
        %v1300 = vunpack.c.l.b16 %v1213
        %v1301 = vunpack.c.h.b16 %v1213
        %v1302 = vunpack.c.l.b16 %v1214
        %v1303 = vunpack.c.h.b16 %v1214
        %v1304 = vunpack.c.l.b16 %v1215
        %v1305 = vunpack.c.h.b16 %v1215
        %v1306 = vunpack.c.l.b16 %v1216
        %v1307 = vunpack.c.h.b16 %v1216
        %v1308 = vunpack.c.l.b16 %v1217
        %v1309 = vunpack.c.h.b16 %v1217
        %v1310 = vunpack.c.l.b16 %v1218
        %v1311 = vunpack.c.h.b16 %v1218
        %v1312 = vunpack.c.l.b16 %v1219
        %v1313 = vunpack.c.h.b16 %v1219
        %v1314 = vunpack.c.l.b16 %v1220
        %v1315 = vunpack.c.h.b16 %v1220
        %v1316 = vunpack.c.l.b16 %v1221
        %v1317 = vunpack.c.h.b16 %v1221
        %v1318 = vunpack.c.l.b16 %v1222
        %v1319 = vunpack.c.h.b16 %v1222
        %v1320 = vunpack.c.l.b16 %v1223
        %v1321 = vunpack.c.h.b16 %v1223
        %v1322 = vunpack.c.l.b16 %v1224
        %v1323 = vunpack.c.h.b16 %v1224
        %v1324 = vunpack.c.l.b16 %v1225
        %v1325 = vunpack.c.h.b16 %v1225
        %v1326 = vunpack.c.l.b16 %v1226
        %v1327 = vunpack.c.h.b16 %v1226
        %v1328 = vunpack.c.l.b16 %v1227
        %v1329 = vunpack.c.h.b16 %v1227
        %v1330 = vunpack.c.l.b16 %v1228
        %v1331 = vunpack.c.h.b16 %v1228
        %v1332 = vpack.c.b16 %v1270, %v1268
        %v1333 = vpack.c.b16 %v1271, %v1269
        %v1334 = vpack.c.b16 %v1274, %v1272
        %v1335 = vpack.c.b16 %v1275, %v1273
        %v1336 = vpack.c.b16 %v1278, %v1276
        %v1337 = vpack.c.b16 %v1279, %v1277
        %v1338 = vpack.c.b16 %v1282, %v1280
        %v1339 = vpack.c.b16 %v1283, %v1281
        %v1340 = vpack.c.b16 %v1286, %v1284
        %v1341 = vpack.c.b16 %v1287, %v1285
        %v1342 = vpack.c.b16 %v1290, %v1288
        %v1343 = vpack.c.b16 %v1291, %v1289
        %v1344 = vpack.c.b16 %v1294, %v1292
        %v1345 = vpack.c.b16 %v1295, %v1293
        %v1346 = vpack.c.b16 %v1298, %v1296
        %v1347 = vpack.c.b16 %v1299, %v1297
        %v1348 = vpack.c.b16 %v1302, %v1300
        %v1349 = vpack.c.b16 %v1303, %v1301
        %v1350 = vpack.c.b16 %v1306, %v1304
        %v1351 = vpack.c.b16 %v1307, %v1305
        %v1352 = vpack.c.b16 %v1310, %v1308
        %v1353 = vpack.c.b16 %v1311, %v1309
        %v1354 = vpack.c.b16 %v1314, %v1312
        %v1355 = vpack.c.b16 %v1315, %v1313
        %v1356 = vpack.c.b16 %v1318, %v1316
        %v1357 = vpack.c.b16 %v1319, %v1317
        %v1358 = vpack.c.b16 %v1322, %v1320
        %v1359 = vpack.c.b16 %v1323, %v1321
        %v1360 = vpack.c.b16 %v1326, %v1324
        %v1361 = vpack.c.b16 %v1327, %v1325
        %v1362 = vpack.c.b16 %v1330, %v1328
        %v1363 = vpack.c.b16 %v1331, %v1329
        %1396 = vmatpush.bf16.msra.mxu0 %v1346
        %1397 = vmatpush.bf16.msra.mxu0 %v1344
        %1398 = vmatpush.bf16.msra.mxu0 %v1342
        %1399 = vmatpush.bf16.msra.mxu0 %v1340
        %1400 = vmatpush.bf16.msra.mxu0 %v1338
        %1401 = vmatpush.bf16.msra.mxu0 %v1336
        %1402 = vmatpush.bf16.msra.mxu0 %v1334
        %1403 = vmatpush.bf16.msra.mxu0 %v1332
        %1404 = vmatmul.bf16.gmra.mxu0 %v1194
        %v1405 = vpop.f32.mrf.mxu0
        %v1406 = vadd.f32 %v1232, %v1405
        %v1407 = vpop.f32.mrf.mxu0
        %1408 = vdwg.mxu0
        %1409 = vmatpush.bf16.msra.mxu0 %v1362
        %1410 = vmatpush.bf16.msra.mxu0 %v1360
        %1411 = vmatpush.bf16.msra.mxu0 %v1358
        %1412 = vmatpush.bf16.msra.mxu0 %v1356
        %1413 = vmatpush.bf16.msra.mxu0 %v1354
        %1414 = vmatpush.bf16.msra.mxu0 %v1352
        %1415 = vmatpush.bf16.msra.mxu0 %v1350
        %1416 = vmatpush.bf16.msra.mxu0 %v1348
        %1417 = vmatmul.bf16.gmra.mxu0 %v1195
        %v1418 = vpop.f32.mrf.mxu0
        %v1419 = vadd.f32 %v1406, %v1418
        %v1420 = vpop.f32.mrf.mxu0
        %1421 = vdwg.mxu0
        %1422 = vmatpush.bf16.msra.mxu0 %v1347
        %1423 = vmatpush.bf16.msra.mxu0 %v1345
        %1424 = vmatpush.bf16.msra.mxu0 %v1343
        %1425 = vmatpush.bf16.msra.mxu0 %v1341
        %1426 = vmatpush.bf16.msra.mxu0 %v1339
        %1427 = vmatpush.bf16.msra.mxu0 %v1337
        %1428 = vmatpush.bf16.msra.mxu0 %v1335
        %1429 = vmatpush.bf16.msra.mxu0 %v1333
        %1430 = vmatmul.bf16.gmra.mxu0 %v1194
        %v1431 = vpop.f32.mrf.mxu0
        %v1432 = vadd.f32 %v1233, %v1431
        %v1433 = vpop.f32.mrf.mxu0
        %1434 = vdwg.mxu0
        %1435 = vmatpush.bf16.msra.mxu0 %v1363
        %1436 = vmatpush.bf16.msra.mxu0 %v1361
        %1437 = vmatpush.bf16.msra.mxu0 %v1359
        %1438 = vmatpush.bf16.msra.mxu0 %v1357
        %1439 = vmatpush.bf16.msra.mxu0 %v1355
        %1440 = vmatpush.bf16.msra.mxu0 %v1353
        %1441 = vmatpush.bf16.msra.mxu0 %v1351
        %1442 = vmatpush.bf16.msra.mxu0 %v1349
        %1443 = vmatmul.bf16.gmra.mxu0 %v1195
        %v1444 = vpop.f32.mrf.mxu0
        %v1445 = vadd.f32 %v1432, %v1444
        %v1446 = vpop.f32.mrf.mxu0
        %1447 = vdwg.mxu0
        %v1448 = vmax.f32 %v1419, 0.0
        %v1449 = vmax.f32 %v1445, 0.0
        %v1450 = vpack.c.bf16 %v1448, %v1448
        %v1451 = vpack.c.bf16 %v1449, %v1449
        %s1452 = scalar_lea.vmem [#allocation8], 1024
        %v1453 = vld [vmem:[%s1452] sm:$0xff]
        %v1454 = vld [vmem:[%s1452 + $0x8] sm:$0xff]
        %v1455 = vld [vmem:[%s1452 + $0x10] sm:$0xff]
        %v1456 = vld [vmem:[%s1452 + $0x18] sm:$0xff]
        %v1457 = vld [vmem:[%s1452 + $0x20] sm:$0xff]
        %v1458 = vld [vmem:[%s1452 + $0x28] sm:$0xff]
        %v1459 = vld [vmem:[%s1452 + $0x30] sm:$0xff]
        %v1460 = vld [vmem:[%s1452 + $0x38] sm:$0xff]
        %v1461 = vld [vmem:[%s1452 + $0x40] sm:$0xff]
        %v1462 = vld [vmem:[%s1452 + $0x48] sm:$0xff]
        %v1463 = vld [vmem:[%s1452 + $0x50] sm:$0xff]
        %v1464 = vld [vmem:[%s1452 + $0x58] sm:$0xff]
        %v1465 = vld [vmem:[%s1452 + $0x60] sm:$0xff]
        %v1466 = vld [vmem:[%s1452 + $0x68] sm:$0xff]
        %v1467 = vld [vmem:[%s1452 + $0x70] sm:$0xff]
        %v1468 = vld [vmem:[%s1452 + $0x78] sm:$0xff]
        %v1469 = vld [vmem:[%s1452 + $0x80] sm:$0xff]
        %v1470 = vld [vmem:[%s1452 + $0x88] sm:$0xff]
        %v1471 = vld [vmem:[%s1452 + $0x90] sm:$0xff]
        %v1472 = vld [vmem:[%s1452 + $0x98] sm:$0xff]
        %v1473 = vld [vmem:[%s1452 + $0xa0] sm:$0xff]
        %v1474 = vld [vmem:[%s1452 + $0xa8] sm:$0xff]
        %v1475 = vld [vmem:[%s1452 + $0xb0] sm:$0xff]
        %v1476 = vld [vmem:[%s1452 + $0xb8] sm:$0xff]
        %v1477 = vld [vmem:[%s1452 + $0xc0] sm:$0xff]
        %v1478 = vld [vmem:[%s1452 + $0xc8] sm:$0xff]
        %v1479 = vld [vmem:[%s1452 + $0xd0] sm:$0xff]
        %v1480 = vld [vmem:[%s1452 + $0xd8] sm:$0xff]
        %v1481 = vld [vmem:[%s1452 + $0xe0] sm:$0xff]
        %v1482 = vld [vmem:[%s1452 + $0xe8] sm:$0xff]
        %v1483 = vld [vmem:[%s1452 + $0xf0] sm:$0xff]
        %v1484 = vld [vmem:[%s1452 + $0xf8] sm:$0xff]
        %s1485 = scalar_lea.vmem [#allocation10], 4
        %v1486 = vld [vmem:[%s1485] ss:$8 sm:$0x3]
        %v1488 = vperm.slane %v1486, 0
        %v1489 = vperm.slane %v1486, 1
        %v1524 = vunpack.c.l.b16 %v1453
        %v1525 = vunpack.c.h.b16 %v1453
        %v1526 = vunpack.c.l.b16 %v1454
        %v1527 = vunpack.c.h.b16 %v1454
        %v1528 = vunpack.c.l.b16 %v1455
        %v1529 = vunpack.c.h.b16 %v1455
        %v1530 = vunpack.c.l.b16 %v1456
        %v1531 = vunpack.c.h.b16 %v1456
        %v1532 = vunpack.c.l.b16 %v1457
        %v1533 = vunpack.c.h.b16 %v1457
        %v1534 = vunpack.c.l.b16 %v1458
        %v1535 = vunpack.c.h.b16 %v1458
        %v1536 = vunpack.c.l.b16 %v1459
        %v1537 = vunpack.c.h.b16 %v1459
        %v1538 = vunpack.c.l.b16 %v1460
        %v1539 = vunpack.c.h.b16 %v1460
        %v1540 = vunpack.c.l.b16 %v1461
        %v1541 = vunpack.c.h.b16 %v1461
        %v1542 = vunpack.c.l.b16 %v1462
        %v1543 = vunpack.c.h.b16 %v1462
        %v1544 = vunpack.c.l.b16 %v1463
        %v1545 = vunpack.c.h.b16 %v1463
        %v1546 = vunpack.c.l.b16 %v1464
        %v1547 = vunpack.c.h.b16 %v1464
        %v1548 = vunpack.c.l.b16 %v1465
        %v1549 = vunpack.c.h.b16 %v1465
        %v1550 = vunpack.c.l.b16 %v1466
        %v1551 = vunpack.c.h.b16 %v1466
        %v1552 = vunpack.c.l.b16 %v1467
        %v1553 = vunpack.c.h.b16 %v1467
        %v1554 = vunpack.c.l.b16 %v1468
        %v1555 = vunpack.c.h.b16 %v1468
        %v1556 = vunpack.c.l.b16 %v1469
        %v1557 = vunpack.c.h.b16 %v1469
        %v1558 = vunpack.c.l.b16 %v1470
        %v1559 = vunpack.c.h.b16 %v1470
        %v1560 = vunpack.c.l.b16 %v1471
        %v1561 = vunpack.c.h.b16 %v1471
        %v1562 = vunpack.c.l.b16 %v1472
        %v1563 = vunpack.c.h.b16 %v1472
        %v1564 = vunpack.c.l.b16 %v1473
        %v1565 = vunpack.c.h.b16 %v1473
        %v1566 = vunpack.c.l.b16 %v1474
        %v1567 = vunpack.c.h.b16 %v1474
        %v1568 = vunpack.c.l.b16 %v1475
        %v1569 = vunpack.c.h.b16 %v1475
        %v1570 = vunpack.c.l.b16 %v1476
        %v1571 = vunpack.c.h.b16 %v1476
        %v1572 = vunpack.c.l.b16 %v1477
        %v1573 = vunpack.c.h.b16 %v1477
        %v1574 = vunpack.c.l.b16 %v1478
        %v1575 = vunpack.c.h.b16 %v1478
        %v1576 = vunpack.c.l.b16 %v1479
        %v1577 = vunpack.c.h.b16 %v1479
        %v1578 = vunpack.c.l.b16 %v1480
        %v1579 = vunpack.c.h.b16 %v1480
        %v1580 = vunpack.c.l.b16 %v1481
        %v1581 = vunpack.c.h.b16 %v1481
        %v1582 = vunpack.c.l.b16 %v1482
        %v1583 = vunpack.c.h.b16 %v1482
        %v1584 = vunpack.c.l.b16 %v1483
        %v1585 = vunpack.c.h.b16 %v1483
        %v1586 = vunpack.c.l.b16 %v1484
        %v1587 = vunpack.c.h.b16 %v1484
        %v1588 = vpack.c.b16 %v1526, %v1524
        %v1589 = vpack.c.b16 %v1527, %v1525
        %v1590 = vpack.c.b16 %v1530, %v1528
        %v1591 = vpack.c.b16 %v1531, %v1529
        %v1592 = vpack.c.b16 %v1534, %v1532
        %v1593 = vpack.c.b16 %v1535, %v1533
        %v1594 = vpack.c.b16 %v1538, %v1536
        %v1595 = vpack.c.b16 %v1539, %v1537
        %v1596 = vpack.c.b16 %v1542, %v1540
        %v1597 = vpack.c.b16 %v1543, %v1541
        %v1598 = vpack.c.b16 %v1546, %v1544
        %v1599 = vpack.c.b16 %v1547, %v1545
        %v1600 = vpack.c.b16 %v1550, %v1548
        %v1601 = vpack.c.b16 %v1551, %v1549
        %v1602 = vpack.c.b16 %v1554, %v1552
        %v1603 = vpack.c.b16 %v1555, %v1553
        %v1604 = vpack.c.b16 %v1558, %v1556
        %v1605 = vpack.c.b16 %v1559, %v1557
        %v1606 = vpack.c.b16 %v1562, %v1560
        %v1607 = vpack.c.b16 %v1563, %v1561
        %v1608 = vpack.c.b16 %v1566, %v1564
        %v1609 = vpack.c.b16 %v1567, %v1565
        %v1610 = vpack.c.b16 %v1570, %v1568
        %v1611 = vpack.c.b16 %v1571, %v1569
        %v1612 = vpack.c.b16 %v1574, %v1572
        %v1613 = vpack.c.b16 %v1575, %v1573
        %v1614 = vpack.c.b16 %v1578, %v1576
        %v1615 = vpack.c.b16 %v1579, %v1577
        %v1616 = vpack.c.b16 %v1582, %v1580
        %v1617 = vpack.c.b16 %v1583, %v1581
        %v1618 = vpack.c.b16 %v1586, %v1584
        %v1619 = vpack.c.b16 %v1587, %v1585
        %1652 = vmatpush.bf16.msra.mxu0 %v1602
        %1653 = vmatpush.bf16.msra.mxu0 %v1600
        %1654 = vmatpush.bf16.msra.mxu0 %v1598
        %1655 = vmatpush.bf16.msra.mxu0 %v1596
        %1656 = vmatpush.bf16.msra.mxu0 %v1594
        %1657 = vmatpush.bf16.msra.mxu0 %v1592
        %1658 = vmatpush.bf16.msra.mxu0 %v1590
        %1659 = vmatpush.bf16.msra.mxu0 %v1588
        %1660 = vmatmul.bf16.gmra.mxu0 %v1450
        %v1661 = vpop.f32.mrf.mxu0
        %v1662 = vadd.f32 %v1488, %v1661
        %v1663 = vpop.f32.mrf.mxu0
        %1664 = vdwg.mxu0
        %1665 = vmatpush.bf16.msra.mxu0 %v1618
        %1666 = vmatpush.bf16.msra.mxu0 %v1616
        %1667 = vmatpush.bf16.msra.mxu0 %v1614
        %1668 = vmatpush.bf16.msra.mxu0 %v1612
        %1669 = vmatpush.bf16.msra.mxu0 %v1610
        %1670 = vmatpush.bf16.msra.mxu0 %v1608
        %1671 = vmatpush.bf16.msra.mxu0 %v1606
        %1672 = vmatpush.bf16.msra.mxu0 %v1604
        %1673 = vmatmul.bf16.gmra.mxu0 %v1451
        %v1674 = vpop.f32.mrf.mxu0
        %v1675 = vadd.f32 %v1662, %v1674
        %v1676 = vpop.f32.mrf.mxu0
        %1677 = vdwg.mxu0
        %1678 = vmatpush.bf16.msra.mxu0 %v1603
        %1679 = vmatpush.bf16.msra.mxu0 %v1601
        %1680 = vmatpush.bf16.msra.mxu0 %v1599
        %1681 = vmatpush.bf16.msra.mxu0 %v1597
        %1682 = vmatpush.bf16.msra.mxu0 %v1595
        %1683 = vmatpush.bf16.msra.mxu0 %v1593
        %1684 = vmatpush.bf16.msra.mxu0 %v1591
        %1685 = vmatpush.bf16.msra.mxu0 %v1589
        %1686 = vmatmul.bf16.gmra.mxu0 %v1450
        %v1687 = vpop.f32.mrf.mxu0
        %v1688 = vadd.f32 %v1489, %v1687
        %v1689 = vpop.f32.mrf.mxu0
        %1690 = vdwg.mxu0
        %1691 = vmatpush.bf16.msra.mxu0 %v1619
        %1692 = vmatpush.bf16.msra.mxu0 %v1617
        %1693 = vmatpush.bf16.msra.mxu0 %v1615
        %1694 = vmatpush.bf16.msra.mxu0 %v1613
        %1695 = vmatpush.bf16.msra.mxu0 %v1611
        %1696 = vmatpush.bf16.msra.mxu0 %v1609
        %1697 = vmatpush.bf16.msra.mxu0 %v1607
        %1698 = vmatpush.bf16.msra.mxu0 %v1605
        %1699 = vmatmul.bf16.gmra.mxu0 %v1451
        %v1700 = vpop.f32.mrf.mxu0
        %v1701 = vadd.f32 %v1688, %v1700
        %v1702 = vpop.f32.mrf.mxu0
        %1703 = vdwg.mxu0
        %v1704 = vmax.f32 %v1675, 0.0
        %v1705 = vmax.f32 %v1701, 0.0
        %v1706 = vpack.c.bf16 %v1704, %v1704
        %v1707 = vpack.c.bf16 %v1705, %v1705
        %s1708 = scalar_lea.vmem [#allocation8], 1280
        %v1709 = vld [vmem:[%s1708] sm:$0xff]
        %v1710 = vld [vmem:[%s1708 + $0x8] sm:$0xff]
        %v1711 = vld [vmem:[%s1708 + $0x10] sm:$0xff]
        %v1712 = vld [vmem:[%s1708 + $0x18] sm:$0xff]
        %v1713 = vld [vmem:[%s1708 + $0x20] sm:$0xff]
        %v1714 = vld [vmem:[%s1708 + $0x28] sm:$0xff]
        %v1715 = vld [vmem:[%s1708 + $0x30] sm:$0xff]
        %v1716 = vld [vmem:[%s1708 + $0x38] sm:$0xff]
        %v1717 = vld [vmem:[%s1708 + $0x40] sm:$0xff]
        %v1718 = vld [vmem:[%s1708 + $0x48] sm:$0xff]
        %v1719 = vld [vmem:[%s1708 + $0x50] sm:$0xff]
        %v1720 = vld [vmem:[%s1708 + $0x58] sm:$0xff]
        %v1721 = vld [vmem:[%s1708 + $0x60] sm:$0xff]
        %v1722 = vld [vmem:[%s1708 + $0x68] sm:$0xff]
        %v1723 = vld [vmem:[%s1708 + $0x70] sm:$0xff]
        %v1724 = vld [vmem:[%s1708 + $0x78] sm:$0xff]
        %v1725 = vld [vmem:[%s1708 + $0x80] sm:$0xff]
        %v1726 = vld [vmem:[%s1708 + $0x88] sm:$0xff]
        %v1727 = vld [vmem:[%s1708 + $0x90] sm:$0xff]
        %v1728 = vld [vmem:[%s1708 + $0x98] sm:$0xff]
        %v1729 = vld [vmem:[%s1708 + $0xa0] sm:$0xff]
        %v1730 = vld [vmem:[%s1708 + $0xa8] sm:$0xff]
        %v1731 = vld [vmem:[%s1708 + $0xb0] sm:$0xff]
        %v1732 = vld [vmem:[%s1708 + $0xb8] sm:$0xff]
        %v1733 = vld [vmem:[%s1708 + $0xc0] sm:$0xff]
        %v1734 = vld [vmem:[%s1708 + $0xc8] sm:$0xff]
        %v1735 = vld [vmem:[%s1708 + $0xd0] sm:$0xff]
        %v1736 = vld [vmem:[%s1708 + $0xd8] sm:$0xff]
        %v1737 = vld [vmem:[%s1708 + $0xe0] sm:$0xff]
        %v1738 = vld [vmem:[%s1708 + $0xe8] sm:$0xff]
        %v1739 = vld [vmem:[%s1708 + $0xf0] sm:$0xff]
        %v1740 = vld [vmem:[%s1708 + $0xf8] sm:$0xff]
        %s1741 = scalar_lea.vmem [#allocation10], 5
        %v1742 = vld [vmem:[%s1741] ss:$8 sm:$0x3]
        %v1744 = vperm.slane %v1742, 0
        %v1745 = vperm.slane %v1742, 1
        %v1780 = vunpack.c.l.b16 %v1709
        %v1781 = vunpack.c.h.b16 %v1709
        %v1782 = vunpack.c.l.b16 %v1710
        %v1783 = vunpack.c.h.b16 %v1710
        %v1784 = vunpack.c.l.b16 %v1711
        %v1785 = vunpack.c.h.b16 %v1711
        %v1786 = vunpack.c.l.b16 %v1712
        %v1787 = vunpack.c.h.b16 %v1712
        %v1788 = vunpack.c.l.b16 %v1713
        %v1789 = vunpack.c.h.b16 %v1713
        %v1790 = vunpack.c.l.b16 %v1714
        %v1791 = vunpack.c.h.b16 %v1714
        %v1792 = vunpack.c.l.b16 %v1715
        %v1793 = vunpack.c.h.b16 %v1715
        %v1794 = vunpack.c.l.b16 %v1716
        %v1795 = vunpack.c.h.b16 %v1716
        %v1796 = vunpack.c.l.b16 %v1717
        %v1797 = vunpack.c.h.b16 %v1717
        %v1798 = vunpack.c.l.b16 %v1718
        %v1799 = vunpack.c.h.b16 %v1718
        %v1800 = vunpack.c.l.b16 %v1719
        %v1801 = vunpack.c.h.b16 %v1719
        %v1802 = vunpack.c.l.b16 %v1720
        %v1803 = vunpack.c.h.b16 %v1720
        %v1804 = vunpack.c.l.b16 %v1721
        %v1805 = vunpack.c.h.b16 %v1721
        %v1806 = vunpack.c.l.b16 %v1722
        %v1807 = vunpack.c.h.b16 %v1722
        %v1808 = vunpack.c.l.b16 %v1723
        %v1809 = vunpack.c.h.b16 %v1723
        %v1810 = vunpack.c.l.b16 %v1724
        %v1811 = vunpack.c.h.b16 %v1724
        %v1812 = vunpack.c.l.b16 %v1725
        %v1813 = vunpack.c.h.b16 %v1725
        %v1814 = vunpack.c.l.b16 %v1726
        %v1815 = vunpack.c.h.b16 %v1726
        %v1816 = vunpack.c.l.b16 %v1727
        %v1817 = vunpack.c.h.b16 %v1727
        %v1818 = vunpack.c.l.b16 %v1728
        %v1819 = vunpack.c.h.b16 %v1728
        %v1820 = vunpack.c.l.b16 %v1729
        %v1821 = vunpack.c.h.b16 %v1729
        %v1822 = vunpack.c.l.b16 %v1730
        %v1823 = vunpack.c.h.b16 %v1730
        %v1824 = vunpack.c.l.b16 %v1731
        %v1825 = vunpack.c.h.b16 %v1731
        %v1826 = vunpack.c.l.b16 %v1732
        %v1827 = vunpack.c.h.b16 %v1732
        %v1828 = vunpack.c.l.b16 %v1733
        %v1829 = vunpack.c.h.b16 %v1733
        %v1830 = vunpack.c.l.b16 %v1734
        %v1831 = vunpack.c.h.b16 %v1734
        %v1832 = vunpack.c.l.b16 %v1735
        %v1833 = vunpack.c.h.b16 %v1735
        %v1834 = vunpack.c.l.b16 %v1736
        %v1835 = vunpack.c.h.b16 %v1736
        %v1836 = vunpack.c.l.b16 %v1737
        %v1837 = vunpack.c.h.b16 %v1737
        %v1838 = vunpack.c.l.b16 %v1738
        %v1839 = vunpack.c.h.b16 %v1738
        %v1840 = vunpack.c.l.b16 %v1739
        %v1841 = vunpack.c.h.b16 %v1739
        %v1842 = vunpack.c.l.b16 %v1740
        %v1843 = vunpack.c.h.b16 %v1740
        %v1844 = vpack.c.b16 %v1782, %v1780
        %v1845 = vpack.c.b16 %v1783, %v1781
        %v1846 = vpack.c.b16 %v1786, %v1784
        %v1847 = vpack.c.b16 %v1787, %v1785
        %v1848 = vpack.c.b16 %v1790, %v1788
        %v1849 = vpack.c.b16 %v1791, %v1789
        %v1850 = vpack.c.b16 %v1794, %v1792
        %v1851 = vpack.c.b16 %v1795, %v1793
        %v1852 = vpack.c.b16 %v1798, %v1796
        %v1853 = vpack.c.b16 %v1799, %v1797
        %v1854 = vpack.c.b16 %v1802, %v1800
        %v1855 = vpack.c.b16 %v1803, %v1801
        %v1856 = vpack.c.b16 %v1806, %v1804
        %v1857 = vpack.c.b16 %v1807, %v1805
        %v1858 = vpack.c.b16 %v1810, %v1808
        %v1859 = vpack.c.b16 %v1811, %v1809
        %v1860 = vpack.c.b16 %v1814, %v1812
        %v1861 = vpack.c.b16 %v1815, %v1813
        %v1862 = vpack.c.b16 %v1818, %v1816
        %v1863 = vpack.c.b16 %v1819, %v1817
        %v1864 = vpack.c.b16 %v1822, %v1820
        %v1865 = vpack.c.b16 %v1823, %v1821
        %v1866 = vpack.c.b16 %v1826, %v1824
        %v1867 = vpack.c.b16 %v1827, %v1825
        %v1868 = vpack.c.b16 %v1830, %v1828
        %v1869 = vpack.c.b16 %v1831, %v1829
        %v1870 = vpack.c.b16 %v1834, %v1832
        %v1871 = vpack.c.b16 %v1835, %v1833
        %v1872 = vpack.c.b16 %v1838, %v1836
        %v1873 = vpack.c.b16 %v1839, %v1837
        %v1874 = vpack.c.b16 %v1842, %v1840
        %v1875 = vpack.c.b16 %v1843, %v1841
        %1908 = vmatpush.bf16.msra.mxu0 %v1858
        %1909 = vmatpush.bf16.msra.mxu0 %v1856
        %1910 = vmatpush.bf16.msra.mxu0 %v1854
        %1911 = vmatpush.bf16.msra.mxu0 %v1852
        %1912 = vmatpush.bf16.msra.mxu0 %v1850
        %1913 = vmatpush.bf16.msra.mxu0 %v1848
        %1914 = vmatpush.bf16.msra.mxu0 %v1846
        %1915 = vmatpush.bf16.msra.mxu0 %v1844
        %1916 = vmatmul.bf16.gmra.mxu0 %v1706
        %v1917 = vpop.f32.mrf.mxu0
        %v1918 = vadd.f32 %v1744, %v1917
        %v1919 = vpop.f32.mrf.mxu0
        %1920 = vdwg.mxu0
        %1921 = vmatpush.bf16.msra.mxu0 %v1874
        %1922 = vmatpush.bf16.msra.mxu0 %v1872
        %1923 = vmatpush.bf16.msra.mxu0 %v1870
        %1924 = vmatpush.bf16.msra.mxu0 %v1868
        %1925 = vmatpush.bf16.msra.mxu0 %v1866
        %1926 = vmatpush.bf16.msra.mxu0 %v1864
        %1927 = vmatpush.bf16.msra.mxu0 %v1862
        %1928 = vmatpush.bf16.msra.mxu0 %v1860
        %1929 = vmatmul.bf16.gmra.mxu0 %v1707
        %v1930 = vpop.f32.mrf.mxu0
        %v1931 = vadd.f32 %v1918, %v1930
        %v1932 = vpop.f32.mrf.mxu0
        %1933 = vdwg.mxu0
        %1934 = vmatpush.bf16.msra.mxu0 %v1859
        %1935 = vmatpush.bf16.msra.mxu0 %v1857
        %1936 = vmatpush.bf16.msra.mxu0 %v1855
        %1937 = vmatpush.bf16.msra.mxu0 %v1853
        %1938 = vmatpush.bf16.msra.mxu0 %v1851
        %1939 = vmatpush.bf16.msra.mxu0 %v1849
        %1940 = vmatpush.bf16.msra.mxu0 %v1847
        %1941 = vmatpush.bf16.msra.mxu0 %v1845
        %1942 = vmatmul.bf16.gmra.mxu0 %v1706
        %v1943 = vpop.f32.mrf.mxu0
        %v1944 = vadd.f32 %v1745, %v1943
        %v1945 = vpop.f32.mrf.mxu0
        %1946 = vdwg.mxu0
        %1947 = vmatpush.bf16.msra.mxu0 %v1875
        %1948 = vmatpush.bf16.msra.mxu0 %v1873
        %1949 = vmatpush.bf16.msra.mxu0 %v1871
        %1950 = vmatpush.bf16.msra.mxu0 %v1869
        %1951 = vmatpush.bf16.msra.mxu0 %v1867
        %1952 = vmatpush.bf16.msra.mxu0 %v1865
        %1953 = vmatpush.bf16.msra.mxu0 %v1863
        %1954 = vmatpush.bf16.msra.mxu0 %v1861
        %1955 = vmatmul.bf16.gmra.mxu0 %v1707
        %v1956 = vpop.f32.mrf.mxu0
        %v1957 = vadd.f32 %v1944, %v1956
        %v1958 = vpop.f32.mrf.mxu0
        %1959 = vdwg.mxu0
        %v1960 = vmax.f32 %v1931, 0.0
        %v1961 = vmax.f32 %v1957, 0.0
        %v1962 = vpack.c.bf16 %v1960, %v1960
        %v1963 = vpack.c.bf16 %v1961, %v1961
        %s1964 = scalar_lea.vmem [#allocation8], 1536
        %v1965 = vld [vmem:[%s1964] sm:$0xff]
        %v1966 = vld [vmem:[%s1964 + $0x8] sm:$0xff]
        %v1967 = vld [vmem:[%s1964 + $0x10] sm:$0xff]
        %v1968 = vld [vmem:[%s1964 + $0x18] sm:$0xff]
        %v1969 = vld [vmem:[%s1964 + $0x20] sm:$0xff]
        %v1970 = vld [vmem:[%s1964 + $0x28] sm:$0xff]
        %v1971 = vld [vmem:[%s1964 + $0x30] sm:$0xff]
        %v1972 = vld [vmem:[%s1964 + $0x38] sm:$0xff]
        %v1973 = vld [vmem:[%s1964 + $0x40] sm:$0xff]
        %v1974 = vld [vmem:[%s1964 + $0x48] sm:$0xff]
        %v1975 = vld [vmem:[%s1964 + $0x50] sm:$0xff]
        %v1976 = vld [vmem:[%s1964 + $0x58] sm:$0xff]
        %v1977 = vld [vmem:[%s1964 + $0x60] sm:$0xff]
        %v1978 = vld [vmem:[%s1964 + $0x68] sm:$0xff]
        %v1979 = vld [vmem:[%s1964 + $0x70] sm:$0xff]
        %v1980 = vld [vmem:[%s1964 + $0x78] sm:$0xff]
        %v1981 = vld [vmem:[%s1964 + $0x80] sm:$0xff]
        %v1982 = vld [vmem:[%s1964 + $0x88] sm:$0xff]
        %v1983 = vld [vmem:[%s1964 + $0x90] sm:$0xff]
        %v1984 = vld [vmem:[%s1964 + $0x98] sm:$0xff]
        %v1985 = vld [vmem:[%s1964 + $0xa0] sm:$0xff]
        %v1986 = vld [vmem:[%s1964 + $0xa8] sm:$0xff]
        %v1987 = vld [vmem:[%s1964 + $0xb0] sm:$0xff]
        %v1988 = vld [vmem:[%s1964 + $0xb8] sm:$0xff]
        %v1989 = vld [vmem:[%s1964 + $0xc0] sm:$0xff]
        %v1990 = vld [vmem:[%s1964 + $0xc8] sm:$0xff]
        %v1991 = vld [vmem:[%s1964 + $0xd0] sm:$0xff]
        %v1992 = vld [vmem:[%s1964 + $0xd8] sm:$0xff]
        %v1993 = vld [vmem:[%s1964 + $0xe0] sm:$0xff]
        %v1994 = vld [vmem:[%s1964 + $0xe8] sm:$0xff]
        %v1995 = vld [vmem:[%s1964 + $0xf0] sm:$0xff]
        %v1996 = vld [vmem:[%s1964 + $0xf8] sm:$0xff]
        %s1997 = scalar_lea.vmem [#allocation10], 6
        %v1998 = vld [vmem:[%s1997] ss:$8 sm:$0x3]
        %v2000 = vperm.slane %v1998, 0
        %v2001 = vperm.slane %v1998, 1
        %v2036 = vunpack.c.l.b16 %v1965
        %v2037 = vunpack.c.h.b16 %v1965
        %v2038 = vunpack.c.l.b16 %v1966
        %v2039 = vunpack.c.h.b16 %v1966
        %v2040 = vunpack.c.l.b16 %v1967
        %v2041 = vunpack.c.h.b16 %v1967
        %v2042 = vunpack.c.l.b16 %v1968
        %v2043 = vunpack.c.h.b16 %v1968
        %v2044 = vunpack.c.l.b16 %v1969
        %v2045 = vunpack.c.h.b16 %v1969
        %v2046 = vunpack.c.l.b16 %v1970
        %v2047 = vunpack.c.h.b16 %v1970
        %v2048 = vunpack.c.l.b16 %v1971
        %v2049 = vunpack.c.h.b16 %v1971
        %v2050 = vunpack.c.l.b16 %v1972
        %v2051 = vunpack.c.h.b16 %v1972
        %v2052 = vunpack.c.l.b16 %v1973
        %v2053 = vunpack.c.h.b16 %v1973
        %v2054 = vunpack.c.l.b16 %v1974
        %v2055 = vunpack.c.h.b16 %v1974
        %v2056 = vunpack.c.l.b16 %v1975
        %v2057 = vunpack.c.h.b16 %v1975
        %v2058 = vunpack.c.l.b16 %v1976
        %v2059 = vunpack.c.h.b16 %v1976
        %v2060 = vunpack.c.l.b16 %v1977
        %v2061 = vunpack.c.h.b16 %v1977
        %v2062 = vunpack.c.l.b16 %v1978
        %v2063 = vunpack.c.h.b16 %v1978
        %v2064 = vunpack.c.l.b16 %v1979
        %v2065 = vunpack.c.h.b16 %v1979
        %v2066 = vunpack.c.l.b16 %v1980
        %v2067 = vunpack.c.h.b16 %v1980
        %v2068 = vunpack.c.l.b16 %v1981
        %v2069 = vunpack.c.h.b16 %v1981
        %v2070 = vunpack.c.l.b16 %v1982
        %v2071 = vunpack.c.h.b16 %v1982
        %v2072 = vunpack.c.l.b16 %v1983
        %v2073 = vunpack.c.h.b16 %v1983
        %v2074 = vunpack.c.l.b16 %v1984
        %v2075 = vunpack.c.h.b16 %v1984
        %v2076 = vunpack.c.l.b16 %v1985
        %v2077 = vunpack.c.h.b16 %v1985
        %v2078 = vunpack.c.l.b16 %v1986
        %v2079 = vunpack.c.h.b16 %v1986
        %v2080 = vunpack.c.l.b16 %v1987
        %v2081 = vunpack.c.h.b16 %v1987
        %v2082 = vunpack.c.l.b16 %v1988
        %v2083 = vunpack.c.h.b16 %v1988
        %v2084 = vunpack.c.l.b16 %v1989
        %v2085 = vunpack.c.h.b16 %v1989
        %v2086 = vunpack.c.l.b16 %v1990
        %v2087 = vunpack.c.h.b16 %v1990
        %v2088 = vunpack.c.l.b16 %v1991
        %v2089 = vunpack.c.h.b16 %v1991
        %v2090 = vunpack.c.l.b16 %v1992
        %v2091 = vunpack.c.h.b16 %v1992
        %v2092 = vunpack.c.l.b16 %v1993
        %v2093 = vunpack.c.h.b16 %v1993
        %v2094 = vunpack.c.l.b16 %v1994
        %v2095 = vunpack.c.h.b16 %v1994
        %v2096 = vunpack.c.l.b16 %v1995
        %v2097 = vunpack.c.h.b16 %v1995
        %v2098 = vunpack.c.l.b16 %v1996
        %v2099 = vunpack.c.h.b16 %v1996
        %v2100 = vpack.c.b16 %v2038, %v2036
        %v2101 = vpack.c.b16 %v2039, %v2037
        %v2102 = vpack.c.b16 %v2042, %v2040
        %v2103 = vpack.c.b16 %v2043, %v2041
        %v2104 = vpack.c.b16 %v2046, %v2044
        %v2105 = vpack.c.b16 %v2047, %v2045
        %v2106 = vpack.c.b16 %v2050, %v2048
        %v2107 = vpack.c.b16 %v2051, %v2049
        %v2108 = vpack.c.b16 %v2054, %v2052
        %v2109 = vpack.c.b16 %v2055, %v2053
        %v2110 = vpack.c.b16 %v2058, %v2056
        %v2111 = vpack.c.b16 %v2059, %v2057
        %v2112 = vpack.c.b16 %v2062, %v2060
        %v2113 = vpack.c.b16 %v2063, %v2061
        %v2114 = vpack.c.b16 %v2066, %v2064
        %v2115 = vpack.c.b16 %v2067, %v2065
        %v2116 = vpack.c.b16 %v2070, %v2068
        %v2117 = vpack.c.b16 %v2071, %v2069
        %v2118 = vpack.c.b16 %v2074, %v2072
        %v2119 = vpack.c.b16 %v2075, %v2073
        %v2120 = vpack.c.b16 %v2078, %v2076
        %v2121 = vpack.c.b16 %v2079, %v2077
        %v2122 = vpack.c.b16 %v2082, %v2080
        %v2123 = vpack.c.b16 %v2083, %v2081
        %v2124 = vpack.c.b16 %v2086, %v2084
        %v2125 = vpack.c.b16 %v2087, %v2085
        %v2126 = vpack.c.b16 %v2090, %v2088
        %v2127 = vpack.c.b16 %v2091, %v2089
        %v2128 = vpack.c.b16 %v2094, %v2092
        %v2129 = vpack.c.b16 %v2095, %v2093
        %v2130 = vpack.c.b16 %v2098, %v2096
        %v2131 = vpack.c.b16 %v2099, %v2097
        %2164 = vmatpush.bf16.msra.mxu0 %v2114
        %2165 = vmatpush.bf16.msra.mxu0 %v2112
        %2166 = vmatpush.bf16.msra.mxu0 %v2110
        %2167 = vmatpush.bf16.msra.mxu0 %v2108
        %2168 = vmatpush.bf16.msra.mxu0 %v2106
        %2169 = vmatpush.bf16.msra.mxu0 %v2104
        %2170 = vmatpush.bf16.msra.mxu0 %v2102
        %2171 = vmatpush.bf16.msra.mxu0 %v2100
        %2172 = vmatmul.bf16.gmra.mxu0 %v1962
        %v2173 = vpop.f32.mrf.mxu0
        %v2174 = vadd.f32 %v2000, %v2173
        %v2175 = vpop.f32.mrf.mxu0
        %2176 = vdwg.mxu0
        %2177 = vmatpush.bf16.msra.mxu0 %v2130
        %2178 = vmatpush.bf16.msra.mxu0 %v2128
        %2179 = vmatpush.bf16.msra.mxu0 %v2126
        %2180 = vmatpush.bf16.msra.mxu0 %v2124
        %2181 = vmatpush.bf16.msra.mxu0 %v2122
        %2182 = vmatpush.bf16.msra.mxu0 %v2120
        %2183 = vmatpush.bf16.msra.mxu0 %v2118
        %2184 = vmatpush.bf16.msra.mxu0 %v2116
        %2185 = vmatmul.bf16.gmra.mxu0 %v1963
        %v2186 = vpop.f32.mrf.mxu0
        %v2187 = vadd.f32 %v2174, %v2186
        %v2188 = vpop.f32.mrf.mxu0
        %2189 = vdwg.mxu0
        %2190 = vmatpush.bf16.msra.mxu0 %v2115
        %2191 = vmatpush.bf16.msra.mxu0 %v2113
        %2192 = vmatpush.bf16.msra.mxu0 %v2111
        %2193 = vmatpush.bf16.msra.mxu0 %v2109
        %2194 = vmatpush.bf16.msra.mxu0 %v2107
        %2195 = vmatpush.bf16.msra.mxu0 %v2105
        %2196 = vmatpush.bf16.msra.mxu0 %v2103
        %2197 = vmatpush.bf16.msra.mxu0 %v2101
        %2198 = vmatmul.bf16.gmra.mxu0 %v1962
        %v2199 = vpop.f32.mrf.mxu0
        %v2200 = vadd.f32 %v2001, %v2199
        %v2201 = vpop.f32.mrf.mxu0
        %2202 = vdwg.mxu0
        %2203 = vmatpush.bf16.msra.mxu0 %v2131
        %2204 = vmatpush.bf16.msra.mxu0 %v2129
        %2205 = vmatpush.bf16.msra.mxu0 %v2127
        %2206 = vmatpush.bf16.msra.mxu0 %v2125
        %2207 = vmatpush.bf16.msra.mxu0 %v2123
        %2208 = vmatpush.bf16.msra.mxu0 %v2121
        %2209 = vmatpush.bf16.msra.mxu0 %v2119
        %2210 = vmatpush.bf16.msra.mxu0 %v2117
        %2211 = vmatmul.bf16.gmra.mxu0 %v1963
        %v2212 = vpop.f32.mrf.mxu0
        %v2213 = vadd.f32 %v2200, %v2212
        %v2214 = vpop.f32.mrf.mxu0
        %2215 = vdwg.mxu0
        %v2216 = vmax.f32 %v2187, 0.0
        %v2217 = vmax.f32 %v2213, 0.0
        %v2218 = vpack.c.bf16 %v2216, %v2216
        %v2219 = vpack.c.bf16 %v2217, %v2217
        %v2220 = vld [vmem:[#allocation11] sm:$0xf]
        %v2221 = vld [vmem:[#allocation11 + $0x4] sm:$0xf]
        %v2222 = vld [vmem:[#allocation11 + $0x8] sm:$0xf]
        %v2223 = vld [vmem:[#allocation11 + $0xc] sm:$0xf]
        %v2224 = vld [vmem:[#allocation11 + $0x10] sm:$0xf]
        %v2225 = vld [vmem:[#allocation11 + $0x14] sm:$0xf]
        %v2226 = vld [vmem:[#allocation11 + $0x18] sm:$0xf]
        %v2227 = vld [vmem:[#allocation11 + $0x1c] sm:$0xf]
        %v2228 = vld [vmem:[#allocation11 + $0x20] sm:$0xf]
        %v2229 = vld [vmem:[#allocation11 + $0x24] sm:$0xf]
        %v2230 = vld [vmem:[#allocation11 + $0x28] sm:$0xf]
        %v2231 = vld [vmem:[#allocation11 + $0x2c] sm:$0xf]
        %v2232 = vld [vmem:[#allocation11 + $0x30] sm:$0xf]
        %v2233 = vld [vmem:[#allocation11 + $0x34] sm:$0xf]
        %v2234 = vld [vmem:[#allocation11 + $0x38] sm:$0xf]
        %v2235 = vld [vmem:[#allocation11 + $0x3c] sm:$0xf]
        %v2236 = vld [vmem:[#allocation11 + $0x40] sm:$0xf]
        %v2237 = vld [vmem:[#allocation11 + $0x44] sm:$0xf]
        %v2238 = vld [vmem:[#allocation11 + $0x48] sm:$0xf]
        %v2239 = vld [vmem:[#allocation11 + $0x4c] sm:$0xf]
        %v2240 = vld [vmem:[#allocation11 + $0x50] sm:$0xf]
        %v2241 = vld [vmem:[#allocation11 + $0x54] sm:$0xf]
        %v2242 = vld [vmem:[#allocation11 + $0x58] sm:$0xf]
        %v2243 = vld [vmem:[#allocation11 + $0x5c] sm:$0xf]
        %v2244 = vld [vmem:[#allocation11 + $0x60] sm:$0xf]
        %v2245 = vld [vmem:[#allocation11 + $0x64] sm:$0xf]
        %v2246 = vld [vmem:[#allocation11 + $0x68] sm:$0xf]
        %v2247 = vld [vmem:[#allocation11 + $0x6c] sm:$0xf]
        %v2248 = vld [vmem:[#allocation11 + $0x70] sm:$0xf]
        %v2249 = vld [vmem:[#allocation11 + $0x74] sm:$0xf]
        %v2250 = vld [vmem:[#allocation11 + $0x78] sm:$0xf]
        %v2251 = vld [vmem:[#allocation11 + $0x7c] sm:$0xf]
        %v2252 = vld [vmem:[%s6] sm:$0x1]
        %v2254 = vperm.slane %v2252, 0
        %v2288 = vunpack.c.l.b16 %v2220
        %v2289 = vunpack.c.l.b16 %v2221
        %v2290 = vunpack.c.l.b16 %v2222
        %v2291 = vunpack.c.l.b16 %v2223
        %v2292 = vunpack.c.l.b16 %v2224
        %v2293 = vunpack.c.l.b16 %v2225
        %v2294 = vunpack.c.l.b16 %v2226
        %v2295 = vunpack.c.l.b16 %v2227
        %v2296 = vunpack.c.l.b16 %v2228
        %v2297 = vunpack.c.l.b16 %v2229
        %v2298 = vunpack.c.l.b16 %v2230
        %v2299 = vunpack.c.l.b16 %v2231
        %v2300 = vunpack.c.l.b16 %v2232
        %v2301 = vunpack.c.l.b16 %v2233
        %v2302 = vunpack.c.l.b16 %v2234
        %v2303 = vunpack.c.l.b16 %v2235
        %v2304 = vunpack.c.l.b16 %v2236
        %v2305 = vunpack.c.l.b16 %v2237
        %v2306 = vunpack.c.l.b16 %v2238
        %v2307 = vunpack.c.l.b16 %v2239
        %v2308 = vunpack.c.l.b16 %v2240
        %v2309 = vunpack.c.l.b16 %v2241
        %v2310 = vunpack.c.l.b16 %v2242
        %v2311 = vunpack.c.l.b16 %v2243
        %v2312 = vunpack.c.l.b16 %v2244
        %v2313 = vunpack.c.l.b16 %v2245
        %v2314 = vunpack.c.l.b16 %v2246
        %v2315 = vunpack.c.l.b16 %v2247
        %v2316 = vunpack.c.l.b16 %v2248
        %v2317 = vunpack.c.l.b16 %v2249
        %v2318 = vunpack.c.l.b16 %v2250
        %v2319 = vunpack.c.l.b16 %v2251
        %v2320 = vpack.c.b16 %v2289, %v2288
        %v2321 = vpack.c.b16 %v2291, %v2290
        %v2322 = vpack.c.b16 %v2293, %v2292
        %v2323 = vpack.c.b16 %v2295, %v2294
        %v2324 = vpack.c.b16 %v2297, %v2296
        %v2325 = vpack.c.b16 %v2299, %v2298
        %v2326 = vpack.c.b16 %v2301, %v2300
        %v2327 = vpack.c.b16 %v2303, %v2302
        %v2328 = vpack.c.b16 %v2305, %v2304
        %v2329 = vpack.c.b16 %v2307, %v2306
        %v2330 = vpack.c.b16 %v2309, %v2308
        %v2331 = vpack.c.b16 %v2311, %v2310
        %v2332 = vpack.c.b16 %v2313, %v2312
        %v2333 = vpack.c.b16 %v2315, %v2314
        %v2334 = vpack.c.b16 %v2317, %v2316
        %v2335 = vpack.c.b16 %v2319, %v2318
        %2352 = vmatpush.bf16.msra.mxu0 %v2327
        %2353 = vmatpush.bf16.msra.mxu0 %v2326
        %2354 = vmatpush.bf16.msra.mxu0 %v2325
        %2355 = vmatpush.bf16.msra.mxu0 %v2324
        %2356 = vmatpush.bf16.msra.mxu0 %v2323
        %2357 = vmatpush.bf16.msra.mxu0 %v2322
        %2358 = vmatpush.bf16.msra.mxu0 %v2321
        %2359 = vmatpush.bf16.msra.mxu0 %v2320
        %2360 = vmatmul.bf16.gmra.mxu0 %v2218
        %v2361 = vpop.f32.mrf.mxu0
        %v2362 = vadd.f32 %v2254, %v2361
        %v2363 = vpop.f32.mrf.mxu0
        %2364 = vdwg.mxu0
        %2365 = vmatpush.bf16.msra.mxu0 %v2335
        %2366 = vmatpush.bf16.msra.mxu0 %v2334
        %2367 = vmatpush.bf16.msra.mxu0 %v2333
        %2368 = vmatpush.bf16.msra.mxu0 %v2332
        %2369 = vmatpush.bf16.msra.mxu0 %v2331
        %2370 = vmatpush.bf16.msra.mxu0 %v2330
        %2371 = vmatpush.bf16.msra.mxu0 %v2329
        %2372 = vmatpush.bf16.msra.mxu0 %v2328
        %2373 = vmatmul.bf16.gmra.mxu0 %v2219
        %v2374 = vpop.f32.mrf.mxu0
        %v2375 = vadd.f32 %v2362, %v2374
        %v2376 = vpop.f32.mrf.mxu0
        %2377 = vdwg.mxu0
        %2378 = vst [vmem:[%s374] sm:$0xff] %v2375
        %s2379 = sand.u32 %s187, 1
        %s2380 = scalar_lea.sflag [#allocation4], %s2379
        %s2381 = sand.u32 %s187, 1
        %s2382 = smul.addr %s2381, 8
        %s2383 = scalar_lea.vmem [#allocation13], %s2382
        // Predicated region
        $region73: #{tpu_custom_call.1} parent=47 // pred_check
          %p2384 = pneg %p197
        $region74: #{tpu_custom_call.1} parent=47 // pred_check_branch
          %2386 = sbr.rel (%p2384) target = $region76
        $region75: #{tpu_custom_call.1} parent=47 // pred_region
          %2388 = vsyncadd %s2380, 0
          %s2389 = smul.addr %s27, 8
          %s2390 = scalar_lea.hbm %s7, %s2389
          %s2392 = sshll.u32 %s2383, 4
          %s2393 = int_to_ptr.vmem [resolvable:$true] %s2392
          %s2394 = sshll.u32 %s2390, 4
          %s2395 = int_to_ptr.hbm [resolvable:$true] %s2394
          %2397 = dma.vmem_to_hbm [thread:$0]  %s2393, 128, %s2395, %s2380
        $region76: #{tpu_custom_call.1} parent=47 // pred_fallthru
          _
      $region48: #{tpu_custom_call.1} parent=5 // pred_fallthru
        _
      %p2398 = scmp.le.s32.totalorder 2, %s22
      // Predicated region
      $region77: #{tpu_custom_call.1} parent=5 // pred_check
        %p2399 = pneg %p2398
      $region78: #{tpu_custom_call.1} parent=5 // pred_check_branch
        %2401 = sbr.rel (%p2399) target = $region80
      $region79: #{tpu_custom_call.1} parent=5 // pred_region
        %s2402 = ssub.s32 %s22, 2
        // Predicated region
        $region81: #{tpu_custom_call.1} parent=79 // pred_check
          %p2403 = pneg %p203
        $region82: #{tpu_custom_call.1} parent=79 // pred_check_branch
          %2405 = sbr.rel (%p2403) target = $region84
        $region83: #{tpu_custom_call.1} parent=79 // pred_region
          %s2406 = sand.u32 %s188, 1
          %s2407 = scalar_lea.sflag [#allocation4], %s2406
          %s2408 = sand.u32 %s188, 1
          %s2409 = smul.addr %s2408, 8
          %s2410 = scalar_lea.vmem [#allocation13], %s2409
          %2412 = dma.done %s2407, 128
        $region84: #{tpu_custom_call.1} parent=79 // pred_fallthru
          _
      $region80: #{tpu_custom_call.1} parent=5 // pred_fallthru
        _
    $region6: #{tpu_custom_call.1} parent=1 // loop_footer
      %s26 = sadd.s32 1, %s22
    $region7: #{tpu_custom_call.1} parent=1 // loop_footer_branch
      %21 = sbr.rel target = $region3
    $region8: #{tpu_custom_call.1} parent=1 // loop_exit
      _
    %2413 = vsyncpa [#allocation3], 1
    %s2414 = scalar_lea.sflag [#allocation3], 1
    %2415 = vsyncpa %s2414, 1
    %2416 = vsyncpa [#allocation6], 1
    %2417 = vsyncpa [#allocation9], 1
    %2418 = vsyncpa [#allocation12], 1
    %2419 = vsyncpa [#allocation4], 1
    %s2420 = scalar_lea.sflag [#allocation4], 1
    %2421 = vsyncpa %s2420, 1

</llo_original>
